<compile_context>
chip_gen: v7x
topology: tpu7x:2x2x1
jax: 0.10.0
libtpu: 0.0.40
codegen_flags: <defaults>
</compile_context>

<pallas_src>
import functools
import math

import jax
import jax.numpy as jnp
from jax import lax
from jax.experimental import pallas as pl
from jax.experimental.pallas import tpu as pltpu

_INV_SQRT2 = 0.7071067811865476
_INV_SQRT_2PI = 0.3989422804014327


def _erf(x):
    # Abramowitz & Stegun 7.1.26 (|err| < 1.5e-7, i.e. exact at f32 precision).
    # TODO(synk): switch to lax.erf if/when a Mosaic lowering is guaranteed.
    ax = jnp.abs(x)
    t = 1.0 / (1.0 + 0.3275911 * ax)
    poly = ((((1.061405429 * t - 1.453152027) * t + 1.421413741) * t
             - 0.284496736) * t + 0.254829592) * t
    y = 1.0 - poly * jnp.exp(-ax * ax)
    return jnp.where(x >= 0, y, -y)


def _ncdf(z):
    return 0.5 * (1.0 + _erf(z * _INV_SQRT2))


def _npdf(z):
    return _INV_SQRT_2PI * jnp.exp(-0.5 * z * z)


def _inverse_gj(a, n):
    # Gauss-Jordan fallback for obs_dim not in {1, 2, 3}.
    dt = a.dtype
    a_rows = [a[i:i + 1, :] for i in range(n)]
    lane = lax.broadcasted_iota(jnp.int32, (1, n), 1)
    e_rows = [(lane == i).astype(dt) for i in range(n)]
    for k in range(n):
        inv_piv = 1.0 / a_rows[k][:, k:k + 1]
        a_rows[k] = a_rows[k] * inv_piv
        e_rows[k] = e_rows[k] * inv_piv
        for i in range(n):
            if i == k:
                continue
            f = a_rows[i][:, k:k + 1]
            a_rows[i] = a_rows[i] - f * a_rows[k]
            e_rows[i] = e_rows[i] - f * e_rows[k]
    return jnp.concatenate(e_rows, axis=0)


def _inv3x3(A):
    # Closed-form adjugate inverse of a 3x3 matrix.
    # TODO(synk): torch.inverse uses LU with partial pivoting; not replicated.
    a = A[0:1, 0:1]; b = A[0:1, 1:2]; c = A[0:1, 2:3]
    d = A[1:2, 0:1]; e = A[1:2, 1:2]; f = A[1:2, 2:3]
    g = A[2:3, 0:1]; h = A[2:3, 1:2]; i = A[2:3, 2:3]
    c00 = e * i - f * h; c01 = c * h - b * i; c02 = b * f - c * e
    c10 = f * g - d * i; c11 = a * i - c * g; c12 = c * d - a * f
    c20 = d * h - e * g; c21 = b * g - a * h; c22 = a * e - b * d
    det = a * c00 + b * c10 + c * c20
    inv_det = 1.0 / det
    r0 = jnp.concatenate([c00, c01, c02], axis=1)
    r1 = jnp.concatenate([c10, c11, c12], axis=1)
    r2 = jnp.concatenate([c20, c21, c22], axis=1)
    return jnp.concatenate([r0, r1, r2], axis=0) * inv_det


def _inv_small(A, n):
    if n == 1:
        return 1.0 / A
    if n == 2:
        a00 = A[0:1, 0:1]; a01 = A[0:1, 1:2]
        a10 = A[1:2, 0:1]; a11 = A[1:2, 1:2]
        inv_det = 1.0 / (a00 * a11 - a01 * a10)
        r0 = jnp.concatenate([a11, -a01], axis=1)
        r1 = jnp.concatenate([-a10, a00], axis=1)
        return jnp.concatenate([r0, r1], axis=0) * inv_det
    if n == 3:
        return _inv3x3(A)
    return _inverse_gj(A, n)


def _tobit_kernel(seq, batch, state_dim, obs_dim, hidden,
                  # inputs
                  x_ref, y0_ref, P0_ref,
                  w_m_ref, b_m_ref, wfc_m_ref, bfc_m_ref,
                  w_fqr_ref, b_fqr_ref, wfc_fqr_ref, bfc_fqr_ref,
                  Ht_ref, Hblk_ref, HblkT_ref, Tl_ref, Tu_ref,
                  eye_bs_ref, eye_bm_ref, blkmask_s_ref, blkmask_m_ref,
                  # outputs
                  out1_ref, out2_ref,
                  # scratch
                  y_s, P_s, hm_s, cm_s, hfqr_s, cfqr_s):
    f32 = jnp.float32
    S, M, Hd, B = state_dim, obs_dim, hidden, batch

    # ---- init recurrent state (single grid step -> unconditional) ----
    y_s[...] = y0_ref[...]
    P_s[...] = P0_ref[...]
    hm_s[...] = jnp.zeros_like(hm_s)
    cm_s[...] = jnp.zeros_like(cm_s)
    hfqr_s[...] = jnp.zeros_like(hfqr_s)
    cfqr_s[...] = jnp.zeros_like(cfqr_s)

    # ---- hoist small loop-invariant constants above the time loop ----
    Ht = Ht_ref[...]            # (S, M)
    H_blk = Hblk_ref[...]       # (B*M, B*S)
    HblkT = HblkT_ref[...]      # (B*S, B*M)
    Tl = Tl_ref[...]            # (1, M)
    Tu = Tu_ref[...]            # (1, M)
    eye_bs = eye_bs_ref[...]    # (B*S, B*S)
    eye_bm = eye_bm_ref[...]    # (B*M, B*M)
    blkmask_s = blkmask_s_ref[...]
    blkmask_m = blkmask_m_ref[...]

    def lane_flatten(a, nrows):
        # (nrows, C) -> (1, nrows*C), row-major, via lane concat of row slices.
        return jnp.concatenate([a[i:i + 1, :] for i in range(nrows)], axis=1)

    def step(t, carry):
        obs = x_ref[t]                                                  # (B, M)

        # ---- mean LSTM (one fused [y|h] gate matmul) + fc_mean ----
        inp_m = jnp.concatenate([y_s[...], hm_s[...]], axis=1)          # (B, S+H)
        gm = (jnp.dot(inp_m, w_m_ref[...], preferred_element_type=f32)
              + b_m_ref[...])                                           # (B, 4H)
        i_m = jax.nn.sigmoid(gm[:, 0:Hd])
        f_m = jax.nn.sigmoid(gm[:, Hd:2 * Hd])
        g_m = jnp.tanh(gm[:, 2 * Hd:3 * Hd])
        o_m = jax.nn.sigmoid(gm[:, 3 * Hd:4 * Hd])
        c_m = f_m * cm_s[...] + i_m * g_m
        h_m = o_m * jnp.tanh(c_m)
        hm_s[...] = h_m
        cm_s[...] = c_m
        y_mid = (jnp.dot(h_m, wfc_m_ref[...], preferred_element_type=f32)
                 + bfc_m_ref[...])                                      # (B, S)
        out1_ref[t] = y_mid

        # ---- fused F/Q/R LSTMs (one gate matmul, gate-major packing) ----
        inp_fqr = jnp.concatenate([y_mid, hfqr_s[...]], axis=1)         # (B, S+3H)
        gf = (jnp.dot(inp_fqr, w_fqr_ref[...], preferred_element_type=f32)
              + b_fqr_ref[...])                                         # (B, 12H)
        G = 3 * Hd
        i_g = jax.nn.sigmoid(gf[:, 0:G])
        f_g = jax.nn.sigmoid(gf[:, G:2 * G])
        g_g = jnp.tanh(gf[:, 2 * G:3 * G])
        o_g = jax.nn.sigmoid(gf[:, 3 * G:4 * G])
        c_fqr = f_g * cfqr_s[...] + i_g * g_g
        h_fqr = o_g * jnp.tanh(c_fqr)
        hfqr_s[...] = h_fqr
        cfqr_s[...] = c_fqr
        # fused fc_F | fc_Q | fc_R projection
        proj = (jnp.dot(h_fqr, wfc_fqr_ref[...], preferred_element_type=f32)
                + bfc_fqr_ref[...])                                     # (B, S*S+S+M)
        F_flat = proj[:, 0:S * S]                                       # (B, S*S)
        Q = jnp.exp(proj[:, S * S:S * S + S])                           # (B, S)
        Rvec = jnp.exp(proj[:, S * S + S:S * S + S + M])                # (B, M)

        # ---- batched tobit statistics (elementwise over (B, M)) ----
        r = jnp.sqrt(Rvec) + 1e-4
        inv_r = pl.reciprocal(r, approx=True)
        z = jnp.dot(y_mid, Ht, preferred_element_type=f32)              # (B, M)
        zl = (Tl - z) * inv_r
        zu = (Tu - z) * inv_r
        cdf_l = _ncdf(zl)
        cdf_u = _ncdf(zu)
        pdf_l = _npdf(zl)
        pdf_u = _npdf(zu)
        p = cdf_u - cdf_l + 1e-4
        inv_p = pl.reciprocal(p, approx=True)
        lam = (pdf_u - pdf_l) * inv_p
        cterm = zl * pdf_l - zu * pdf_u
        Ey = p * (z - r * lam) + cdf_l * Tl + (1.0 - cdf_u) * Tu
        Rnew = Rvec * (cterm * inv_p + 1.0 - lam * lam)                 # diag of R'
        d = obs - Ey                                                    # (B, M)

        # flatten batch rows into lane-major rows for the block-diag algebra
        q_row = lane_flatten(Q, B)                                      # (1, B*S)
        p_row = lane_flatten(p, B)                                      # (1, B*M)
        rnew_row = lane_flatten(Rnew, B)                                # (1, B*M)
        d_row = lane_flatten(d, B)                                      # (1, B*M)

        # ---- block-diagonal Kalman predict + tobit update (whole batch) ----
        f_rows = [F_flat[b:b + 1, i * S:(i + 1) * S]
                  for b in range(B) for i in range(S)]
        Fstack = jnp.concatenate(f_rows, axis=0)                        # (B*S, S)
        F_blk = jnp.concatenate([Fstack] * B, axis=1) * blkmask_s       # (B*S, B*S)

        P_blk = P_s[...]
        FP = jnp.dot(F_blk, P_blk, preferred_element_type=f32)
        Ppred = (jnp.dot(FP, F_blk.T, preferred_element_type=f32)
                 + eye_bs * q_row)                                      # (B*S, B*S)

        R1 = jnp.dot(Ppred, HblkT, preferred_element_type=f32) * p_row  # P H^T Pun
        HR1 = jnp.dot(H_blk, R1, preferred_element_type=f32)            # (B*M, B*M)
        p_col = jnp.sum(eye_bm * p_row, axis=-1, keepdims=True)         # (B*M, 1)
        R2 = p_col * HR1 + eye_bm * rnew_row                            # block-diag

        # closed-form inverse of each (M, M) diagonal block, reassembled
        R2stack = R2[:, 0:M]
        for b in range(1, B):
            R2stack = R2stack + R2[:, b * M:(b + 1) * M]                # (B*M, M)
        inv_blocks = [_inv_small(R2stack[b * M:(b + 1) * M, :], M)
                      for b in range(B)]
        inv_stack = jnp.concatenate(inv_blocks, axis=0)                 # (B*M, M)
        R2inv = jnp.concatenate([inv_stack] * B, axis=1) * blkmask_m    # (B*M, B*M)

        K = jnp.dot(R1, R2inv, preferred_element_type=f32)              # (B*S, B*M)
        delta_row = jnp.dot(d_row, K.T, preferred_element_type=f32)     # (1, B*S)
        delta = jnp.concatenate(
            [delta_row[:, b * S:(b + 1) * S] for b in range(B)], axis=0)  # (B, S)
        y_new = y_mid + delta

        KPunH = jnp.dot(K * p_row, H_blk, preferred_element_type=f32)   # (B*S, B*S)
        P_new = Ppred - jnp.dot(KPunH, Ppred, preferred_element_type=f32)

        y_s[...] = y_new
        P_s[...] = P_new
        out2_ref[t] = y_new
        return carry

    lax.fori_loop(0, seq, step, 0)


def _pack_params(params, batch, obs_dim, hidden, state_dim):
    """Host-side packing of the PyTorch-style parameters into fused matrices."""
    f32 = jnp.float32
    Hd, S, M = hidden, state_dim, obs_dim

    # mean LSTM: fused [input | hidden] weight, gate order (i, f, g, o)
    w_m = jnp.concatenate([params["wih_m"], params["whh_m"]], axis=0).astype(f32)
    b_m = params["b_m"].astype(f32)
    wfc_m = params["wfc_m"].astype(f32)
    bfc_m = params["bfc_m"].astype(f32)

    # fused F/Q/R gate weight, gate-major columns: [i_F i_Q i_R | f.. | g.. | o..]
    w_fqr = jnp.zeros((S + 3 * Hd, 12 * Hd), f32)
    b_fqr = jnp.zeros((1, 12 * Hd), f32)
    for li, nm in enumerate(("f", "q", "r")):
        wih = params[f"wih_{nm}"].astype(f32)       # (S, 4H)
        whh = params[f"whh_{nm}"].astype(f32)       # (H, 4H)
        bb = params[f"b_{nm}"].astype(f32)          # (1, 4H)
        for gi in range(4):
            c0 = gi * 3 * Hd + li * Hd
            w_fqr = w_fqr.at[0:S, c0:c0 + Hd].set(wih[:, gi * Hd:(gi + 1) * Hd])
            w_fqr = w_fqr.at[S + li * Hd:S + (li + 1) * Hd, c0:c0 + Hd].set(
                whh[:, gi * Hd:(gi + 1) * Hd])
            b_fqr = b_fqr.at[0:1, c0:c0 + Hd].set(bb[:, gi * Hd:(gi + 1) * Hd])

    # fused fc_F | fc_Q | fc_R (block diagonal over the packed [h_F|h_Q|h_R])
    od = [S * S, S, M]
    offs = [0, od[0], od[0] + od[1]]
    total = sum(od)
    wfc_fqr = jnp.zeros((3 * Hd, total), f32)
    bfc_fqr = jnp.zeros((1, total), f32)
    for li, nm in enumerate(("f", "q", "r")):
        wfc = params[f"wfc_{nm}"].astype(f32)
        bfc = params[f"bfc_{nm}"].astype(f32)
        wfc_fqr = wfc_fqr.at[li * Hd:(li + 1) * Hd, offs[li]:offs[li] + od[li]].set(wfc)
        bfc_fqr = bfc_fqr.at[0:1, offs[li]:offs[li] + od[li]].set(bfc)

    Hm = params["H"].astype(f32)                    # (M, S)
    eyeB = jnp.eye(batch, dtype=f32)
    Ht = Hm.T                                       # (S, M)
    H_blk = jnp.kron(eyeB, Hm)                      # (B*M, B*S)
    HblkT = H_blk.T                                 # (B*S, B*M)
    Tl = params["Tl"].astype(f32)                   # (1, M)
    Tu = params["Tu"].astype(f32)                   # (1, M)
    eye_bs = jnp.eye(batch * S, dtype=f32)
    eye_bm = jnp.eye(batch * M, dtype=f32)
    blkmask_s = jnp.kron(eyeB, jnp.ones((S, S), f32))
    blkmask_m = jnp.kron(eyeB, jnp.ones((M, M), f32))

    return (w_m, b_m, wfc_m, bfc_m, w_fqr, b_fqr, wfc_fqr, bfc_fqr,
            Ht, H_blk, HblkT, Tl, Tu, eye_bs, eye_bm, blkmask_s, blkmask_m)


def tobit_kalman_lstm_pallas(x, y0, P0, params, hidden_dim):
    f32 = jnp.float32
    seq, batch, obs_dim = x.shape
    state_dim = y0.shape[0]

    y0_b = jnp.broadcast_to(y0[None, :], (batch, state_dim)).astype(f32)
    P0_blk = jnp.kron(jnp.eye(batch, dtype=f32), P0.astype(f32))
    packed = _pack_params(params, batch, obs_dim, hidden_dim, state_dim)
    inputs = (x.astype(f32), y0_b, P0_blk) + packed

    def full(arr):
        nd = arr.ndim
        return pl.BlockSpec(arr.shape, lambda i, _nd=nd: (0,) * _nd)

    in_specs = [full(a) for a in inputs]
    out_specs = [pl.BlockSpec((seq, batch, state_dim), lambda i: (0, 0, 0)),
                 pl.BlockSpec((seq, batch, state_dim), lambda i: (0, 0, 0))]
    out_shape = [jax.ShapeDtypeStruct((seq, batch, state_dim), f32),
                 jax.ShapeDtypeStruct((seq, batch, state_dim), f32)]
    scratch_shapes = [
        pltpu.VMEM((batch, state_dim), f32),                        # y (filtered mean)
        pltpu.VMEM((batch * state_dim, batch * state_dim), f32),    # P (block-diag)
        pltpu.VMEM((batch, hidden_dim), f32),                       # h_mean
        pltpu.VMEM((batch, hidden_dim), f32),                       # c_mean
        pltpu.VMEM((batch, 3 * hidden_dim), f32),                   # h_{F,Q,R} packed
        pltpu.VMEM((batch, 3 * hidden_dim), f32),                   # c_{F,Q,R} packed
    ]

    kernel = functools.partial(_tobit_kernel, seq, batch, state_dim,
                               obs_dim, hidden_dim)

    out1, out2 = pl.pallas_call(
        kernel,
        grid=(1,),
        in_specs=in_specs,
        out_specs=out_specs,
        out_shape=out_shape,
        scratch_shapes=scratch_shapes,
        compiler_params=pltpu.CompilerParams(dimension_semantics=("arbitrary",)),
    )(*inputs)
    return out1, out2


def init_params(key, obs_dim, hidden_dim, state_dim):
    f32 = jnp.float32
    keys = iter(jax.random.split(key, 32))
    s_h = 1.0 / math.sqrt(hidden_dim)

    def unif(shape, scale):
        return jax.random.uniform(next(keys), shape, f32, -scale, scale)

    params = {}
    for name, out_dim in (("m", state_dim),
                          ("f", state_dim * state_dim),
                          ("q", state_dim),
                          ("r", obs_dim)):
        w_ih = unif((4 * hidden_dim, state_dim), s_h)   # PyTorch LSTMCell shapes
        w_hh = unif((4 * hidden_dim, hidden_dim), s_h)
        b_ih = unif((4 * hidden_dim,), s_h)
        b_hh = unif((4 * hidden_dim,), s_h)
        params[f"wih_{name}"] = w_ih.T                  # (state_dim, 4H)
        params[f"whh_{name}"] = w_hh.T                  # (H, 4H)
        params[f"b_{name}"] = (b_ih + b_hh)[None, :]    # (1, 4H)
        w_fc = unif((out_dim, hidden_dim), s_h)         # nn.Linear(hidden, out)
        b_fc = unif((out_dim,), s_h)
        params[f"wfc_{name}"] = w_fc.T                  # (H, out)
        params[f"bfc_{name}"] = b_fc[None, :]           # (1, out)

    params["H"] = jax.random.uniform(next(keys), (obs_dim, state_dim), f32, -0.5, 0.5)
    params["Tl"] = jnp.full((1, obs_dim), -2.0, f32)
    params["Tu"] = jnp.full((1, obs_dim), 2.0, f32)
    return params


if __name__ == "__main__":
    key = jax.random.PRNGKey(0)
    seq, batch = 8, 2
    obs_dim, hidden_dim, state_dim = 3, 32, 4

    kp, kx, ky = jax.random.split(key, 3)
    params = init_params(kp, obs_dim, hidden_dim, state_dim)
    x = jax.random.normal(kx, (seq, batch, obs_dim), jnp.float32)
    y0 = jax.random.normal(ky, (state_dim,), jnp.float32) * 0.1
    P0 = jnp.eye(state_dim, dtype=jnp.float32)

    out1, out2 = tobit_kalman_lstm_pallas(x, y0, P0, params, hidden_dim)
    jax.block_until_ready((out1, out2))

    assert out1.shape == (seq, batch, state_dim)
    assert out2.shape == (seq, batch, state_dim)
    assert bool(jnp.all(jnp.isfinite(out1))) and bool(jnp.all(jnp.isfinite(out2)))
    print("KERNEL_OK")
</pallas_src>

<mosaic_0001>
module attributes {stable_mosaic.version = 11 : i64} {
  func.func @_tobit_kernel(%arg0: i32, %arg1: memref<8x2x3xf32, #tpu.memory_space<vmem>>, %arg2: memref<2x4xf32, #tpu.memory_space<vmem>>, %arg3: memref<8x8xf32, #tpu.memory_space<vmem>>, %arg4: memref<36x128xf32, #tpu.memory_space<vmem>>, %arg5: memref<1x128xf32, #tpu.memory_space<vmem>>, %arg6: memref<32x4xf32, #tpu.memory_space<vmem>>, %arg7: memref<1x4xf32, #tpu.memory_space<vmem>>, %arg8: memref<100x384xf32, #tpu.memory_space<vmem>>, %arg9: memref<1x384xf32, #tpu.memory_space<vmem>>, %arg10: memref<96x23xf32, #tpu.memory_space<vmem>>, %arg11: memref<1x23xf32, #tpu.memory_space<vmem>>, %arg12: memref<4x3xf32, #tpu.memory_space<vmem>>, %arg13: memref<6x8xf32, #tpu.memory_space<vmem>>, %arg14: memref<8x6xf32, #tpu.memory_space<vmem>>, %arg15: memref<1x3xf32, #tpu.memory_space<vmem>>, %arg16: memref<1x3xf32, #tpu.memory_space<vmem>>, %arg17: memref<8x8xf32, #tpu.memory_space<vmem>>, %arg18: memref<6x6xf32, #tpu.memory_space<vmem>>, %arg19: memref<8x8xf32, #tpu.memory_space<vmem>>, %arg20: memref<6x6xf32, #tpu.memory_space<vmem>>, %arg21: memref<8x2x4xf32, #tpu.memory_space<vmem>>, %arg22: memref<8x2x4xf32, #tpu.memory_space<vmem>>, %arg23: memref<2x4xf32, #tpu.memory_space<vmem>>, %arg24: memref<8x8xf32, #tpu.memory_space<vmem>>, %arg25: memref<2x32xf32, #tpu.memory_space<vmem>>, %arg26: memref<2x32xf32, #tpu.memory_space<vmem>>, %arg27: memref<2x96xf32, #tpu.memory_space<vmem>>, %arg28: memref<2x96xf32, #tpu.memory_space<vmem>>) attributes {dimension_semantics = [#tpu.dimension_semantics<arbitrary>], iteration_bounds = array<i64: 1>, scalar_prefetch = 0 : i64, scratch_operands = 6 : i64, tpu.core_type = #tpu.core_type<tc>, window_params = [{pipeline_mode = #tpu.pipeline_mode<synchronous>, transform_indices = @transform_0, window_bounds = array<i64: 8, 2, 3>}, {pipeline_mode = #tpu.pipeline_mode<synchronous>, transform_indices = @transform_1, window_bounds = array<i64: 2, 4>}, {pipeline_mode = #tpu.pipeline_mode<synchronous>, transform_indices = @transform_2, window_bounds = array<i64: 8, 8>}, {pipeline_mode = #tpu.pipeline_mode<synchronous>, transform_indices = @transform_3, window_bounds = array<i64: 36, 128>}, {pipeline_mode = #tpu.pipeline_mode<synchronous>, transform_indices = @transform_4, window_bounds = array<i64: 1, 128>}, {pipeline_mode = #tpu.pipeline_mode<synchronous>, transform_indices = @transform_5, window_bounds = array<i64: 32, 4>}, {pipeline_mode = #tpu.pipeline_mode<synchronous>, transform_indices = @transform_6, window_bounds = array<i64: 1, 4>}, {pipeline_mode = #tpu.pipeline_mode<synchronous>, transform_indices = @transform_7, window_bounds = array<i64: 100, 384>}, {pipeline_mode = #tpu.pipeline_mode<synchronous>, transform_indices = @transform_8, window_bounds = array<i64: 1, 384>}, {pipeline_mode = #tpu.pipeline_mode<synchronous>, transform_indices = @transform_9, window_bounds = array<i64: 96, 23>}, {pipeline_mode = #tpu.pipeline_mode<synchronous>, transform_indices = @transform_10, window_bounds = array<i64: 1, 23>}, {pipeline_mode = #tpu.pipeline_mode<synchronous>, transform_indices = @transform_11, window_bounds = array<i64: 4, 3>}, {pipeline_mode = #tpu.pipeline_mode<synchronous>, transform_indices = @transform_12, window_bounds = array<i64: 6, 8>}, {pipeline_mode = #tpu.pipeline_mode<synchronous>, transform_indices = @transform_13, window_bounds = array<i64: 8, 6>}, {pipeline_mode = #tpu.pipeline_mode<synchronous>, transform_indices = @transform_14, window_bounds = array<i64: 1, 3>}, {pipeline_mode = #tpu.pipeline_mode<synchronous>, transform_indices = @transform_15, window_bounds = array<i64: 1, 3>}, {pipeline_mode = #tpu.pipeline_mode<synchronous>, transform_indices = @transform_16, window_bounds = array<i64: 8, 8>}, {pipeline_mode = #tpu.pipeline_mode<synchronous>, transform_indices = @transform_17, window_bounds = array<i64: 6, 6>}, {pipeline_mode = #tpu.pipeline_mode<synchronous>, transform_indices = @transform_18, window_bounds = array<i64: 8, 8>}, {pipeline_mode = #tpu.pipeline_mode<synchronous>, transform_indices = @transform_19, window_bounds = array<i64: 6, 6>}, {pipeline_mode = #tpu.pipeline_mode<synchronous>, transform_indices = @transform_20, window_bounds = array<i64: 8, 2, 4>}, {pipeline_mode = #tpu.pipeline_mode<synchronous>, transform_indices = @transform_21, window_bounds = array<i64: 8, 2, 4>}]} {
    %c0 = arith.constant 0 : index
    %c0_0 = arith.constant 0 : index
    %0 = vector.load %arg2[%c0, %c0_0] : memref<2x4xf32, #tpu.memory_space<vmem>>, vector<2x4xf32>
    %c0_1 = arith.constant 0 : index
    %c0_2 = arith.constant 0 : index
    %1 = vector.load %arg23[%c0_1, %c0_2] : memref<2x4xf32, #tpu.memory_space<vmem>>, vector<2x4xf32>
    tpu.vector_store %arg23[%c0_1, %c0_2], %0 {strides = array<i32>} : memref<2x4xf32, #tpu.memory_space<vmem>>, vector<2x4xf32>,
    %c0_3 = arith.constant 0 : index
    %c0_4 = arith.constant 0 : index
    %2 = vector.load %arg3[%c0_3, %c0_4] : memref<8x8xf32, #tpu.memory_space<vmem>>, vector<8x8xf32>
    %c0_5 = arith.constant 0 : index
    %c0_6 = arith.constant 0 : index
    %3 = vector.load %arg24[%c0_5, %c0_6] : memref<8x8xf32, #tpu.memory_space<vmem>>, vector<8x8xf32>
    tpu.vector_store %arg24[%c0_5, %c0_6], %2 {strides = array<i32>} : memref<8x8xf32, #tpu.memory_space<vmem>>, vector<8x8xf32>,
    %cst = arith.constant 0.000000e+00 : f32
    %4 = vector.broadcast %cst : f32 to vector<2x32xf32>
    %c0_7 = arith.constant 0 : index
    %c0_8 = arith.constant 0 : index
    %5 = vector.load %arg25[%c0_7, %c0_8] : memref<2x32xf32, #tpu.memory_space<vmem>>, vector<2x32xf32>
    tpu.vector_store %arg25[%c0_7, %c0_8], %4 {strides = array<i32>} : memref<2x32xf32, #tpu.memory_space<vmem>>, vector<2x32xf32>,
    %cst_9 = arith.constant 0.000000e+00 : f32
    %6 = vector.broadcast %cst_9 : f32 to vector<2x32xf32>
    %c0_10 = arith.constant 0 : index
    %c0_11 = arith.constant 0 : index
    %7 = vector.load %arg26[%c0_10, %c0_11] : memref<2x32xf32, #tpu.memory_space<vmem>>, vector<2x32xf32>
    tpu.vector_store %arg26[%c0_10, %c0_11], %6 {strides = array<i32>} : memref<2x32xf32, #tpu.memory_space<vmem>>, vector<2x32xf32>,
    %cst_12 = arith.constant 0.000000e+00 : f32
    %8 = vector.broadcast %cst_12 : f32 to vector<2x96xf32>
    %c0_13 = arith.constant 0 : index
    %c0_14 = arith.constant 0 : index
    %9 = vector.load %arg27[%c0_13, %c0_14] : memref<2x96xf32, #tpu.memory_space<vmem>>, vector<2x96xf32>
    tpu.vector_store %arg27[%c0_13, %c0_14], %8 {strides = array<i32>} : memref<2x96xf32, #tpu.memory_space<vmem>>, vector<2x96xf32>,
    %cst_15 = arith.constant 0.000000e+00 : f32
    %10 = vector.broadcast %cst_15 : f32 to vector<2x96xf32>
    %c0_16 = arith.constant 0 : index
    %c0_17 = arith.constant 0 : index
    %11 = vector.load %arg28[%c0_16, %c0_17] : memref<2x96xf32, #tpu.memory_space<vmem>>, vector<2x96xf32>
    tpu.vector_store %arg28[%c0_16, %c0_17], %10 {strides = array<i32>} : memref<2x96xf32, #tpu.memory_space<vmem>>, vector<2x96xf32>,
    %c0_18 = arith.constant 0 : index
    %c0_19 = arith.constant 0 : index
    %12 = vector.load %arg12[%c0_18, %c0_19] : memref<4x3xf32, #tpu.memory_space<vmem>>, vector<4x3xf32>
    %c0_20 = arith.constant 0 : index
    %c0_21 = arith.constant 0 : index
    %13 = vector.load %arg13[%c0_20, %c0_21] : memref<6x8xf32, #tpu.memory_space<vmem>>, vector<6x8xf32>
    %c0_22 = arith.constant 0 : index
    %c0_23 = arith.constant 0 : index
    %14 = vector.load %arg14[%c0_22, %c0_23] : memref<8x6xf32, #tpu.memory_space<vmem>>, vector<8x6xf32>
    %c0_24 = arith.constant 0 : index
    %c0_25 = arith.constant 0 : index
    %15 = vector.load %arg15[%c0_24, %c0_25] : memref<1x3xf32, #tpu.memory_space<vmem>>, vector<1x3xf32>
    %c0_26 = arith.constant 0 : index
    %c0_27 = arith.constant 0 : index
    %16 = vector.load %arg16[%c0_26, %c0_27] : memref<1x3xf32, #tpu.memory_space<vmem>>, vector<1x3xf32>
    %c0_28 = arith.constant 0 : index
    %c0_29 = arith.constant 0 : index
    %17 = vector.load %arg17[%c0_28, %c0_29] : memref<8x8xf32, #tpu.memory_space<vmem>>, vector<8x8xf32>
    %c0_30 = arith.constant 0 : index
    %c0_31 = arith.constant 0 : index
    %18 = vector.load %arg18[%c0_30, %c0_31] : memref<6x6xf32, #tpu.memory_space<vmem>>, vector<6x6xf32>
    %c0_32 = arith.constant 0 : index
    %c0_33 = arith.constant 0 : index
    %19 = vector.load %arg19[%c0_32, %c0_33] : memref<8x8xf32, #tpu.memory_space<vmem>>, vector<8x8xf32>
    %c0_34 = arith.constant 0 : index
    %c0_35 = arith.constant 0 : index
    %20 = vector.load %arg20[%c0_34, %c0_35] : memref<6x6xf32, #tpu.memory_space<vmem>>, vector<6x6xf32>
    %c0_i32 = arith.constant 0 : i32
    %c8_i32 = arith.constant 8 : i32
    %21 = arith.addi %c0_i32, %c8_i32 : i32
    %c1_i32 = arith.constant 1 : i32
    scf.for %arg29 = %c0_i32 to %21 step %c1_i32  : i32 {
      %22 = arith.index_cast %arg29 : i32 to index
      %c0_37 = arith.constant 0 : index
      %c0_38 = arith.constant 0 : index
      %23 = vector.load %arg1[%22, %c0_37, %c0_38] : memref<8x2x3xf32, #tpu.memory_space<vmem>>, vector<1x2x3xf32>
      %24 = vector.shape_cast %23 : vector<1x2x3xf32> to vector<2x3xf32>
      %c0_39 = arith.constant 0 : index
      %c0_40 = arith.constant 0 : index
      %25 = vector.load %arg23[%c0_39, %c0_40] : memref<2x4xf32, #tpu.memory_space<vmem>>, vector<2x4xf32>
      %c0_41 = arith.constant 0 : index
      %c0_42 = arith.constant 0 : index
      %26 = vector.load %arg25[%c0_41, %c0_42] : memref<2x32xf32, #tpu.memory_space<vmem>>, vector<2x32xf32>
      %27 = tpu.concatenate %25, %26 in 1 : vector<2x4xf32>, vector<2x32xf32> -> vector<2x36xf32>
      %c0_43 = arith.constant 0 : index
      %c0_44 = arith.constant 0 : index
      %28 = vector.load %arg4[%c0_43, %c0_44] : memref<36x128xf32, #tpu.memory_space<vmem>>, vector<36x128xf32>
      %cst_45 = arith.constant dense<0.000000e+00> : vector<2x128xf32>
      %29 = tpu.matmul %27, %28, %cst_45 {dimension_numbers = #tpu.dot_dimension_numbers<[1], [0], [0], [1], [0, 0, 1, 1], [], []>} : vector<2x36xf32>, vector<36x128xf32>, vector<2x128xf32> -> vector<2x128xf32>
      %c0_46 = arith.constant 0 : index
      %c0_47 = arith.constant 0 : index
      %30 = vector.load %arg5[%c0_46, %c0_47] : memref<1x128xf32, #tpu.memory_space<vmem>>, vector<1x128xf32>
      %31 = vector.broadcast %30 : vector<1x128xf32> to vector<2x128xf32>
      %32 = arith.addf %29, %31 : vector<2x128xf32>
      %33 = vector.extract_strided_slice %32 {offsets = [0, 0], sizes = [2, 32], strides = [1, 1]} : vector<2x128xf32> to vector<2x32xf32>
      %34 = arith.negf %33 : vector<2x32xf32>
      %35 = math.exp %34 : vector<2x32xf32>
      %cst_48 = arith.constant 1.000000e+00 : f32
      %36 = vector.broadcast %cst_48 : f32 to vector<2x32xf32>
      %37 = arith.addf %36, %35 : vector<2x32xf32>
      %38 = arith.divf %36, %37 : vector<2x32xf32>
      %39 = vector.extract_strided_slice %32 {offsets = [0, 32], sizes = [2, 32], strides = [1, 1]} : vector<2x128xf32> to vector<2x32xf32>
      %40 = arith.negf %39 : vector<2x32xf32>
      %41 = math.exp %40 : vector<2x32xf32>
      %cst_49 = arith.constant 1.000000e+00 : f32
      %42 = vector.broadcast %cst_49 : f32 to vector<2x32xf32>
      %43 = arith.addf %42, %41 : vector<2x32xf32>
      %44 = arith.divf %42, %43 : vector<2x32xf32>
      %45 = vector.extract_strided_slice %32 {offsets = [0, 64], sizes = [2, 32], strides = [1, 1]} : vector<2x128xf32> to vector<2x32xf32>
      %46 = math.tanh %45 : vector<2x32xf32>
      %47 = vector.extract_strided_slice %32 {offsets = [0, 96], sizes = [2, 32], strides = [1, 1]} : vector<2x128xf32> to vector<2x32xf32>
      %48 = arith.negf %47 : vector<2x32xf32>
      %49 = math.exp %48 : vector<2x32xf32>
      %cst_50 = arith.constant 1.000000e+00 : f32
      %50 = vector.broadcast %cst_50 : f32 to vector<2x32xf32>
      %51 = arith.addf %50, %49 : vector<2x32xf32>
      %52 = arith.divf %50, %51 : vector<2x32xf32>
      %c0_51 = arith.constant 0 : index
      %c0_52 = arith.constant 0 : index
      %53 = vector.load %arg26[%c0_51, %c0_52] : memref<2x32xf32, #tpu.memory_space<vmem>>, vector<2x32xf32>
      %54 = arith.mulf %44, %53 : vector<2x32xf32>
      %55 = arith.mulf %38, %46 : vector<2x32xf32>
      %56 = arith.addf %54, %55 : vector<2x32xf32>
      %57 = math.tanh %56 : vector<2x32xf32>
      %58 = arith.mulf %52, %57 : vector<2x32xf32>
      %c0_53 = arith.constant 0 : index
      %c0_54 = arith.constant 0 : index
      %59 = vector.load %arg25[%c0_53, %c0_54] : memref<2x32xf32, #tpu.memory_space<vmem>>, vector<2x32xf32>
      tpu.vector_store %arg25[%c0_53, %c0_54], %58 {strides = array<i32>} : memref<2x32xf32, #tpu.memory_space<vmem>>, vector<2x32xf32>,
      %c0_55 = arith.constant 0 : index
      %c0_56 = arith.constant 0 : index
      %60 = vector.load %arg26[%c0_55, %c0_56] : memref<2x32xf32, #tpu.memory_space<vmem>>, vector<2x32xf32>
      tpu.vector_store %arg26[%c0_55, %c0_56], %56 {strides = array<i32>} : memref<2x32xf32, #tpu.memory_space<vmem>>, vector<2x32xf32>,
      %c0_57 = arith.constant 0 : index
      %c0_58 = arith.constant 0 : index
      %61 = vector.load %arg6[%c0_57, %c0_58] : memref<32x4xf32, #tpu.memory_space<vmem>>, vector<32x4xf32>
      %cst_59 = arith.constant dense<0.000000e+00> : vector<2x4xf32>
      %62 = tpu.matmul %58, %61, %cst_59 {dimension_numbers = #tpu.dot_dimension_numbers<[1], [0], [0], [1], [0, 0, 1, 1], [], []>} : vector<2x32xf32>, vector<32x4xf32>, vector<2x4xf32> -> vector<2x4xf32>
      %c0_60 = arith.constant 0 : index
      %c0_61 = arith.constant 0 : index
      %63 = vector.load %arg7[%c0_60, %c0_61] : memref<1x4xf32, #tpu.memory_space<vmem>>, vector<1x4xf32>
      %64 = vector.broadcast %63 : vector<1x4xf32> to vector<2x4xf32>
      %65 = arith.addf %62, %64 : vector<2x4xf32>
      %66 = arith.index_cast %arg29 : i32 to index
      %c0_62 = arith.constant 0 : index
      %c0_63 = arith.constant 0 : index
      %67 = vector.load %arg21[%66, %c0_62, %c0_63] : memref<8x2x4xf32, #tpu.memory_space<vmem>>, vector<1x2x4xf32>
      %68 = vector.shape_cast %67 : vector<1x2x4xf32> to vector<2x4xf32>
      %69 = vector.shape_cast %65 : vector<2x4xf32> to vector<1x2x4xf32>
      tpu.vector_store %arg21[%66, %c0_62, %c0_63], %69 {strides = array<i32>} : memref<8x2x4xf32, #tpu.memory_space<vmem>>, vector<1x2x4xf32>,
      %c0_64 = arith.constant 0 : index
      %c0_65 = arith.constant 0 : index
      %70 = vector.load %arg27[%c0_64, %c0_65] : memref<2x96xf32, #tpu.memory_space<vmem>>, vector<2x96xf32>
      %71 = tpu.concatenate %65, %70 in 1 : vector<2x4xf32>, vector<2x96xf32> -> vector<2x100xf32>
      %c0_66 = arith.constant 0 : index
      %c0_67 = arith.constant 0 : index
      %72 = vector.load %arg8[%c0_66, %c0_67] : memref<100x384xf32, #tpu.memory_space<vmem>>, vector<100x384xf32>
      %cst_68 = arith.constant dense<0.000000e+00> : vector<2x384xf32>
      %73 = tpu.matmul %71, %72, %cst_68 {dimension_numbers = #tpu.dot_dimension_numbers<[1], [0], [0], [1], [0, 0, 1, 1], [], []>} : vector<2x100xf32>, vector<100x384xf32>, vector<2x384xf32> -> vector<2x384xf32>
      %c0_69 = arith.constant 0 : index
      %c0_70 = arith.constant 0 : index
      %74 = vector.load %arg9[%c0_69, %c0_70] : memref<1x384xf32, #tpu.memory_space<vmem>>, vector<1x384xf32>
      %75 = vector.broadcast %74 : vector<1x384xf32> to vector<2x384xf32>
      %76 = arith.addf %73, %75 : vector<2x384xf32>
      %77 = vector.extract_strided_slice %76 {offsets = [0, 0], sizes = [2, 96], strides = [1, 1]} : vector<2x384xf32> to vector<2x96xf32>
      %78 = arith.negf %77 : vector<2x96xf32>
      %79 = math.exp %78 : vector<2x96xf32>
      %cst_71 = arith.constant 1.000000e+00 : f32
      %80 = vector.broadcast %cst_71 : f32 to vector<2x96xf32>
      %81 = arith.addf %80, %79 : vector<2x96xf32>
      %82 = arith.divf %80, %81 : vector<2x96xf32>
      %83 = vector.extract_strided_slice %76 {offsets = [0, 96], sizes = [2, 96], strides = [1, 1]} : vector<2x384xf32> to vector<2x96xf32>
      %84 = arith.negf %83 : vector<2x96xf32>
      %85 = math.exp %84 : vector<2x96xf32>
      %cst_72 = arith.constant 1.000000e+00 : f32
      %86 = vector.broadcast %cst_72 : f32 to vector<2x96xf32>
      %87 = arith.addf %86, %85 : vector<2x96xf32>
      %88 = arith.divf %86, %87 : vector<2x96xf32>
      %89 = vector.extract_strided_slice %76 {offsets = [0, 192], sizes = [2, 96], strides = [1, 1]} : vector<2x384xf32> to vector<2x96xf32>
      %90 = math.tanh %89 : vector<2x96xf32>
      %91 = vector.extract_strided_slice %76 {offsets = [0, 288], sizes = [2, 96], strides = [1, 1]} : vector<2x384xf32> to vector<2x96xf32>
      %92 = arith.negf %91 : vector<2x96xf32>
      %93 = math.exp %92 : vector<2x96xf32>
      %cst_73 = arith.constant 1.000000e+00 : f32
      %94 = vector.broadcast %cst_73 : f32 to vector<2x96xf32>
      %95 = arith.addf %94, %93 : vector<2x96xf32>
      %96 = arith.divf %94, %95 : vector<2x96xf32>
      %c0_74 = arith.constant 0 : index
      %c0_75 = arith.constant 0 : index
      %97 = vector.load %arg28[%c0_74, %c0_75] : memref<2x96xf32, #tpu.memory_space<vmem>>, vector<2x96xf32>
      %98 = arith.mulf %88, %97 : vector<2x96xf32>
      %99 = arith.mulf %82, %90 : vector<2x96xf32>
      %100 = arith.addf %98, %99 : vector<2x96xf32>
      %101 = math.tanh %100 : vector<2x96xf32>
      %102 = arith.mulf %96, %101 : vector<2x96xf32>
      %c0_76 = arith.constant 0 : index
      %c0_77 = arith.constant 0 : index
      %103 = vector.load %arg27[%c0_76, %c0_77] : memref<2x96xf32, #tpu.memory_space<vmem>>, vector<2x96xf32>
      tpu.vector_store %arg27[%c0_76, %c0_77], %102 {strides = array<i32>} : memref<2x96xf32, #tpu.memory_space<vmem>>, vector<2x96xf32>,
      %c0_78 = arith.constant 0 : index
      %c0_79 = arith.constant 0 : index
      %104 = vector.load %arg28[%c0_78, %c0_79] : memref<2x96xf32, #tpu.memory_space<vmem>>, vector<2x96xf32>
      tpu.vector_store %arg28[%c0_78, %c0_79], %100 {strides = array<i32>} : memref<2x96xf32, #tpu.memory_space<vmem>>, vector<2x96xf32>,
      %c0_80 = arith.constant 0 : index
      %c0_81 = arith.constant 0 : index
      %105 = vector.load %arg10[%c0_80, %c0_81] : memref<96x23xf32, #tpu.memory_space<vmem>>, vector<96x23xf32>
      %cst_82 = arith.constant dense<0.000000e+00> : vector<2x23xf32>
      %106 = tpu.matmul %102, %105, %cst_82 {dimension_numbers = #tpu.dot_dimension_numbers<[1], [0], [0], [1], [0, 0, 1, 1], [], []>} : vector<2x96xf32>, vector<96x23xf32>, vector<2x23xf32> -> vector<2x23xf32>
      %c0_83 = arith.constant 0 : index
      %c0_84 = arith.constant 0 : index
      %107 = vector.load %arg11[%c0_83, %c0_84] : memref<1x23xf32, #tpu.memory_space<vmem>>, vector<1x23xf32>
      %108 = vector.broadcast %107 : vector<1x23xf32> to vector<2x23xf32>
      %109 = arith.addf %106, %108 : vector<2x23xf32>
      %110 = vector.extract_strided_slice %109 {offsets = [0, 0], sizes = [2, 16], strides = [1, 1]} : vector<2x23xf32> to vector<2x16xf32>
      %111 = vector.extract_strided_slice %109 {offsets = [0, 16], sizes = [2, 4], strides = [1, 1]} : vector<2x23xf32> to vector<2x4xf32>
      %112 = math.exp %111 : vector<2x4xf32>
      %113 = vector.extract_strided_slice %109 {offsets = [0, 20], sizes = [2, 3], strides = [1, 1]} : vector<2x23xf32> to vector<2x3xf32>
      %114 = math.exp %113 : vector<2x3xf32>
      %115 = math.sqrt %114 : vector<2x3xf32>
      %cst_85 = arith.constant 9.99999974E-5 : f32
      %116 = vector.broadcast %cst_85 : f32 to vector<2x3xf32>
      %117 = arith.addf %115, %116 : vector<2x3xf32>
      %118 = tpu.reciprocal %117 {approx = true} : vector<2x3xf32> -> vector<2x3xf32>
      %cst_86 = arith.constant dense<0.000000e+00> : vector<2x3xf32>
      %119 = tpu.matmul %65, %12, %cst_86 {dimension_numbers = #tpu.dot_dimension_numbers<[1], [0], [0], [1], [0, 0, 1, 1], [], []>} : vector<2x4xf32>, vector<4x3xf32>, vector<2x3xf32> -> vector<2x3xf32>
      %120 = vector.broadcast %15 : vector<1x3xf32> to vector<2x3xf32>
      %121 = arith.subf %120, %119 : vector<2x3xf32>
      %122 = arith.mulf %121, %118 : vector<2x3xf32>
      %123 = vector.broadcast %16 : vector<1x3xf32> to vector<2x3xf32>
      %124 = arith.subf %123, %119 : vector<2x3xf32>
      %125 = arith.mulf %124, %118 : vector<2x3xf32>
      %cst_87 = arith.constant 0.707106769 : f32
      %126 = vector.broadcast %cst_87 : f32 to vector<2x3xf32>
      %127 = arith.mulf %122, %126 : vector<2x3xf32>
      %128 = math.absf %127 : vector<2x3xf32>
      %cst_88 = arith.constant 0.327591091 : f32
      %129 = vector.broadcast %cst_88 : f32 to vector<2x3xf32>
      %130 = arith.mulf %129, %128 : vector<2x3xf32>
      %cst_89 = arith.constant 1.000000e+00 : f32
      %131 = vector.broadcast %cst_89 : f32 to vector<2x3xf32>
      %132 = arith.addf %131, %130 : vector<2x3xf32>
      %cst_90 = arith.constant 1.000000e+00 : f32
      %133 = vector.broadcast %cst_90 : f32 to vector<2x3xf32>
      %134 = arith.divf %133, %132 : vector<2x3xf32>
      %cst_91 = arith.constant 1.06140542 : f32
      %135 = vector.broadcast %cst_91 : f32 to vector<2x3xf32>
      %136 = arith.mulf %135, %134 : vector<2x3xf32>
      %cst_92 = arith.constant 1.45315206 : f32
      %137 = vector.broadcast %cst_92 : f32 to vector<2x3xf32>
      %138 = arith.subf %136, %137 : vector<2x3xf32>
      %139 = arith.mulf %138, %134 : vector<2x3xf32>
      %cst_93 = arith.constant 1.42141378 : f32
      %140 = vector.broadcast %cst_93 : f32 to vector<2x3xf32>
      %141 = arith.addf %139, %140 : vector<2x3xf32>
      %142 = arith.mulf %141, %134 : vector<2x3xf32>
      %cst_94 = arith.constant 0.284496725 : f32
      %143 = vector.broadcast %cst_94 : f32 to vector<2x3xf32>
      %144 = arith.subf %142, %143 : vector<2x3xf32>
      %145 = arith.mulf %144, %134 : vector<2x3xf32>
      %cst_95 = arith.constant 0.254829586 : f32
      %146 = vector.broadcast %cst_95 : f32 to vector<2x3xf32>
      %147 = arith.addf %145, %146 : vector<2x3xf32>
      %148 = arith.mulf %147, %134 : vector<2x3xf32>
      %cst_96 = arith.constant 0.000000e+00 : f32
      %149 = vector.broadcast %cst_96 : f32 to vector<2x3xf32>
      %150 = arith.subf %149, %128 : vector<2x3xf32>
      %151 = arith.mulf %150, %128 : vector<2x3xf32>
      %152 = math.exp %151 : vector<2x3xf32>
      %153 = arith.mulf %148, %152 : vector<2x3xf32>
      %cst_97 = arith.constant 1.000000e+00 : f32
      %154 = vector.broadcast %cst_97 : f32 to vector<2x3xf32>
      %155 = arith.subf %154, %153 : vector<2x3xf32>
      %cst_98 = arith.constant 0.000000e+00 : f32
      %156 = vector.broadcast %cst_98 : f32 to vector<2x3xf32>
      %157 = arith.cmpf oge, %127, %156 : vector<2x3xf32>
      %cst_99 = arith.constant 0.000000e+00 : f32
      %158 = vector.broadcast %cst_99 : f32 to vector<2x3xf32>
      %159 = arith.subf %158, %155 : vector<2x3xf32>
      %160 = arith.select %157, %155, %159 : vector<2x3xi1>, vector<2x3xf32>
      %cst_100 = arith.constant 1.000000e+00 : f32
      %161 = vector.broadcast %cst_100 : f32 to vector<2x3xf32>
      %162 = arith.addf %161, %160 : vector<2x3xf32>
      %cst_101 = arith.constant 5.000000e-01 : f32
      %163 = vector.broadcast %cst_101 : f32 to vector<2x3xf32>
      %164 = arith.mulf %163, %162 : vector<2x3xf32>
      %cst_102 = arith.constant 0.707106769 : f32
      %165 = vector.broadcast %cst_102 : f32 to vector<2x3xf32>
      %166 = arith.mulf %125, %165 : vector<2x3xf32>
      %167 = math.absf %166 : vector<2x3xf32>
      %cst_103 = arith.constant 0.327591091 : f32
      %168 = vector.broadcast %cst_103 : f32 to vector<2x3xf32>
      %169 = arith.mulf %168, %167 : vector<2x3xf32>
      %cst_104 = arith.constant 1.000000e+00 : f32
      %170 = vector.broadcast %cst_104 : f32 to vector<2x3xf32>
      %171 = arith.addf %170, %169 : vector<2x3xf32>
      %cst_105 = arith.constant 1.000000e+00 : f32
      %172 = vector.broadcast %cst_105 : f32 to vector<2x3xf32>
      %173 = arith.divf %172, %171 : vector<2x3xf32>
      %cst_106 = arith.constant 1.06140542 : f32
      %174 = vector.broadcast %cst_106 : f32 to vector<2x3xf32>
      %175 = arith.mulf %174, %173 : vector<2x3xf32>
      %cst_107 = arith.constant 1.45315206 : f32
      %176 = vector.broadcast %cst_107 : f32 to vector<2x3xf32>
      %177 = arith.subf %175, %176 : vector<2x3xf32>
      %178 = arith.mulf %177, %173 : vector<2x3xf32>
      %cst_108 = arith.constant 1.42141378 : f32
      %179 = vector.broadcast %cst_108 : f32 to vector<2x3xf32>
      %180 = arith.addf %178, %179 : vector<2x3xf32>
      %181 = arith.mulf %180, %173 : vector<2x3xf32>
      %cst_109 = arith.constant 0.284496725 : f32
      %182 = vector.broadcast %cst_109 : f32 to vector<2x3xf32>
      %183 = arith.subf %181, %182 : vector<2x3xf32>
      %184 = arith.mulf %183, %173 : vector<2x3xf32>
      %cst_110 = arith.constant 0.254829586 : f32
      %185 = vector.broadcast %cst_110 : f32 to vector<2x3xf32>
      %186 = arith.addf %184, %185 : vector<2x3xf32>
      %187 = arith.mulf %186, %173 : vector<2x3xf32>
      %cst_111 = arith.constant 0.000000e+00 : f32
      %188 = vector.broadcast %cst_111 : f32 to vector<2x3xf32>
      %189 = arith.subf %188, %167 : vector<2x3xf32>
      %190 = arith.mulf %189, %167 : vector<2x3xf32>
      %191 = math.exp %190 : vector<2x3xf32>
      %192 = arith.mulf %187, %191 : vector<2x3xf32>
      %cst_112 = arith.constant 1.000000e+00 : f32
      %193 = vector.broadcast %cst_112 : f32 to vector<2x3xf32>
      %194 = arith.subf %193, %192 : vector<2x3xf32>
      %cst_113 = arith.constant 0.000000e+00 : f32
      %195 = vector.broadcast %cst_113 : f32 to vector<2x3xf32>
      %196 = arith.cmpf oge, %166, %195 : vector<2x3xf32>
      %cst_114 = arith.constant 0.000000e+00 : f32
      %197 = vector.broadcast %cst_114 : f32 to vector<2x3xf32>
      %198 = arith.subf %197, %194 : vector<2x3xf32>
      %199 = arith.select %196, %194, %198 : vector<2x3xi1>, vector<2x3xf32>
      %cst_115 = arith.constant 1.000000e+00 : f32
      %200 = vector.broadcast %cst_115 : f32 to vector<2x3xf32>
      %201 = arith.addf %200, %199 : vector<2x3xf32>
      %cst_116 = arith.constant 5.000000e-01 : f32
      %202 = vector.broadcast %cst_116 : f32 to vector<2x3xf32>
      %203 = arith.mulf %202, %201 : vector<2x3xf32>
      %cst_117 = arith.constant -5.000000e-01 : f32
      %204 = vector.broadcast %cst_117 : f32 to vector<2x3xf32>
      %205 = arith.mulf %204, %122 : vector<2x3xf32>
      %206 = arith.mulf %205, %122 : vector<2x3xf32>
      %207 = math.exp %206 : vector<2x3xf32>
      %cst_118 = arith.constant 0.398942292 : f32
      %208 = vector.broadcast %cst_118 : f32 to vector<2x3xf32>
      %209 = arith.mulf %208, %207 : vector<2x3xf32>
      %cst_119 = arith.constant -5.000000e-01 : f32
      %210 = vector.broadcast %cst_119 : f32 to vector<2x3xf32>
      %211 = arith.mulf %210, %125 : vector<2x3xf32>
      %212 = arith.mulf %211, %125 : vector<2x3xf32>
      %213 = math.exp %212 : vector<2x3xf32>
      %cst_120 = arith.constant 0.398942292 : f32
      %214 = vector.broadcast %cst_120 : f32 to vector<2x3xf32>
      %215 = arith.mulf %214, %213 : vector<2x3xf32>
      %216 = arith.subf %203, %164 : vector<2x3xf32>
      %cst_121 = arith.constant 9.99999974E-5 : f32
      %217 = vector.broadcast %cst_121 : f32 to vector<2x3xf32>
      %218 = arith.addf %216, %217 : vector<2x3xf32>
      %219 = tpu.reciprocal %218 {approx = true} : vector<2x3xf32> -> vector<2x3xf32>
      %220 = arith.subf %215, %209 : vector<2x3xf32>
      %221 = arith.mulf %220, %219 : vector<2x3xf32>
      %222 = arith.mulf %122, %209 : vector<2x3xf32>
      %223 = arith.mulf %125, %215 : vector<2x3xf32>
      %224 = arith.subf %222, %223 : vector<2x3xf32>
      %225 = arith.mulf %117, %221 : vector<2x3xf32>
      %226 = arith.subf %119, %225 : vector<2x3xf32>
      %227 = arith.mulf %218, %226 : vector<2x3xf32>
      %228 = vector.broadcast %15 : vector<1x3xf32> to vector<2x3xf32>
      %229 = arith.mulf %164, %228 : vector<2x3xf32>
      %230 = arith.addf %227, %229 : vector<2x3xf32>
      %cst_122 = arith.constant 1.000000e+00 : f32
      %231 = vector.broadcast %cst_122 : f32 to vector<2x3xf32>
      %232 = arith.subf %231, %203 : vector<2x3xf32>
      %233 = vector.broadcast %16 : vector<1x3xf32> to vector<2x3xf32>
      %234 = arith.mulf %232, %233 : vector<2x3xf32>
      %235 = arith.addf %230, %234 : vector<2x3xf32>
      %236 = arith.mulf %224, %219 : vector<2x3xf32>
      %cst_123 = arith.constant 1.000000e+00 : f32
      %237 = vector.broadcast %cst_123 : f32 to vector<2x3xf32>
      %238 = arith.addf %236, %237 : vector<2x3xf32>
      %239 = arith.mulf %221, %221 : vector<2x3xf32>
      %240 = arith.subf %238, %239 : vector<2x3xf32>
      %241 = arith.mulf %114, %240 : vector<2x3xf32>
      %242 = arith.subf %24, %235 : vector<2x3xf32>
      %243 = vector.extract_strided_slice %112 {offsets = [0, 0], sizes = [1, 4], strides = [1, 1]} : vector<2x4xf32> to vector<1x4xf32>
      %244 = vector.extract_strided_slice %112 {offsets = [1, 0], sizes = [1, 4], strides = [1, 1]} : vector<2x4xf32> to vector<1x4xf32>
      %245 = tpu.concatenate %243, %244 in 1 : vector<1x4xf32>, vector<1x4xf32> -> vector<1x8xf32>
      %246 = vector.extract_strided_slice %218 {offsets = [0, 0], sizes = [1, 3], strides = [1, 1]} : vector<2x3xf32> to vector<1x3xf32>
      %247 = vector.extract_strided_slice %218 {offsets = [1, 0], sizes = [1, 3], strides = [1, 1]} : vector<2x3xf32> to vector<1x3xf32>
      %248 = tpu.concatenate %246, %247 in 1 : vector<1x3xf32>, vector<1x3xf32> -> vector<1x6xf32>
      %249 = vector.extract_strided_slice %241 {offsets = [0, 0], sizes = [1, 3], strides = [1, 1]} : vector<2x3xf32> to vector<1x3xf32>
      %250 = vector.extract_strided_slice %241 {offsets = [1, 0], sizes = [1, 3], strides = [1, 1]} : vector<2x3xf32> to vector<1x3xf32>
      %251 = tpu.concatenate %249, %250 in 1 : vector<1x3xf32>, vector<1x3xf32> -> vector<1x6xf32>
      %252 = vector.extract_strided_slice %242 {offsets = [0, 0], sizes = [1, 3], strides = [1, 1]} : vector<2x3xf32> to vector<1x3xf32>
      %253 = vector.extract_strided_slice %242 {offsets = [1, 0], sizes = [1, 3], strides = [1, 1]} : vector<2x3xf32> to vector<1x3xf32>
      %254 = tpu.concatenate %252, %253 in 1 : vector<1x3xf32>, vector<1x3xf32> -> vector<1x6xf32>
      %255 = vector.extract_strided_slice %110 {offsets = [0, 0], sizes = [1, 4], strides = [1, 1]} : vector<2x16xf32> to vector<1x4xf32>
      %256 = vector.extract_strided_slice %110 {offsets = [0, 4], sizes = [1, 4], strides = [1, 1]} : vector<2x16xf32> to vector<1x4xf32>
      %257 = vector.extract_strided_slice %110 {offsets = [0, 8], sizes = [1, 4], strides = [1, 1]} : vector<2x16xf32> to vector<1x4xf32>
      %258 = vector.extract_strided_slice %110 {offsets = [0, 12], sizes = [1, 4], strides = [1, 1]} : vector<2x16xf32> to vector<1x4xf32>
      %259 = vector.extract_strided_slice %110 {offsets = [1, 0], sizes = [1, 4], strides = [1, 1]} : vector<2x16xf32> to vector<1x4xf32>
      %260 = vector.extract_strided_slice %110 {offsets = [1, 4], sizes = [1, 4], strides = [1, 1]} : vector<2x16xf32> to vector<1x4xf32>
      %261 = vector.extract_strided_slice %110 {offsets = [1, 8], sizes = [1, 4], strides = [1, 1]} : vector<2x16xf32> to vector<1x4xf32>
      %262 = vector.extract_strided_slice %110 {offsets = [1, 12], sizes = [1, 4], strides = [1, 1]} : vector<2x16xf32> to vector<1x4xf32>
      %263 = tpu.concatenate %255, %256, %257, %258, %259, %260, %261, %262 in 0 : vector<1x4xf32>, vector<1x4xf32>, vector<1x4xf32>, vector<1x4xf32>, vector<1x4xf32>, vector<1x4xf32>, vector<1x4xf32>, vector<1x4xf32> -> vector<8x4xf32>
      %264 = tpu.concatenate %263, %263 in 1 : vector<8x4xf32>, vector<8x4xf32> -> vector<8x8xf32>
      %265 = arith.mulf %264, %19 : vector<8x8xf32>
      %c0_124 = arith.constant 0 : index
      %c0_125 = arith.constant 0 : index
      %266 = vector.load %arg24[%c0_124, %c0_125] : memref<8x8xf32, #tpu.memory_space<vmem>>, vector<8x8xf32>
      %cst_126 = arith.constant dense<0.000000e+00> : vector<8x8xf32>
      %267 = tpu.matmul %265, %266, %cst_126 {dimension_numbers = #tpu.dot_dimension_numbers<[1], [0], [0], [1], [0, 0, 1, 1], [], []>} : vector<8x8xf32>, vector<8x8xf32>, vector<8x8xf32> -> vector<8x8xf32>
      %268 = tpu.transpose %265, [1, 0] : vector<8x8xf32> -> vector<8x8xf32>
      %cst_127 = arith.constant dense<0.000000e+00> : vector<8x8xf32>
      %269 = tpu.matmul %267, %268, %cst_127 {dimension_numbers = #tpu.dot_dimension_numbers<[1], [0], [0], [1], [0, 0, 1, 1], [], []>} : vector<8x8xf32>, vector<8x8xf32>, vector<8x8xf32> -> vector<8x8xf32>
      %270 = vector.broadcast %245 : vector<1x8xf32> to vector<8x8xf32>
      %271 = arith.mulf %17, %270 : vector<8x8xf32>
      %272 = arith.addf %269, %271 : vector<8x8xf32>
      %cst_128 = arith.constant dense<0.000000e+00> : vector<8x6xf32>
      %273 = tpu.matmul %272, %14, %cst_128 {dimension_numbers = #tpu.dot_dimension_numbers<[1], [0], [0], [1], [0, 0, 1, 1], [], []>} : vector<8x8xf32>, vector<8x6xf32>, vector<8x6xf32> -> vector<8x6xf32>
      %274 = vector.broadcast %248 : vector<1x6xf32> to vector<8x6xf32>
      %275 = arith.mulf %273, %274 : vector<8x6xf32>
      %cst_129 = arith.constant dense<0.000000e+00> : vector<6x6xf32>
      %276 = tpu.matmul %13, %275, %cst_129 {dimension_numbers = #tpu.dot_dimension_numbers<[1], [0], [0], [1], [0, 0, 1, 1], [], []>} : vector<6x8xf32>, vector<8x6xf32>, vector<6x6xf32> -> vector<6x6xf32>
      %277 = vector.broadcast %248 : vector<1x6xf32> to vector<6x6xf32>
      %278 = arith.mulf %18, %277 : vector<6x6xf32>
      %cst_130 = arith.constant dense<0.000000e+00> : vector<6xf32>
      %279 = vector.multi_reduction <add>, %278, %cst_130 [1] : vector<6x6xf32> to vector<6xf32>
      %280 = vector.shape_cast %279 : vector<6xf32> to vector<6x1xf32>
      %281 = vector.broadcast %280 : vector<6x1xf32> to vector<6x6xf32>
      %282 = arith.mulf %281, %276 : vector<6x6xf32>
      %283 = vector.broadcast %251 : vector<1x6xf32> to vector<6x6xf32>
      %284 = arith.mulf %18, %283 : vector<6x6xf32>
      %285 = arith.addf %282, %284 : vector<6x6xf32>
      %286 = vector.extract_strided_slice %285 {offsets = [0, 0], sizes = [6, 3], strides = [1, 1]} : vector<6x6xf32> to vector<6x3xf32>
      %287 = vector.extract_strided_slice %285 {offsets = [0, 3], sizes = [6, 3], strides = [1, 1]} : vector<6x6xf32> to vector<6x3xf32>
      %288 = arith.addf %286, %287 : vector<6x3xf32>
      %289 = vector.extract_strided_slice %288 {offsets = [0, 0], sizes = [3, 3], strides = [1, 1]} : vector<6x3xf32> to vector<3x3xf32>
      %290 = vector.extract_strided_slice %289 {offsets = [0, 0], sizes = [1, 1], strides = [1, 1]} : vector<3x3xf32> to vector<1x1xf32>
      %291 = vector.extract_strided_slice %289 {offsets = [0, 1], sizes = [1, 1], strides = [1, 1]} : vector<3x3xf32> to vector<1x1xf32>
      %292 = vector.extract_strided_slice %289 {offsets = [0, 2], sizes = [1, 1], strides = [1, 1]} : vector<3x3xf32> to vector<1x1xf32>
      %293 = vector.extract_strided_slice %289 {offsets = [1, 0], sizes = [1, 1], strides = [1, 1]} : vector<3x3xf32> to vector<1x1xf32>
      %294 = vector.extract_strided_slice %289 {offsets = [1, 1], sizes = [1, 1], strides = [1, 1]} : vector<3x3xf32> to vector<1x1xf32>
      %295 = vector.extract_strided_slice %289 {offsets = [1, 2], sizes = [1, 1], strides = [1, 1]} : vector<3x3xf32> to vector<1x1xf32>
      %296 = vector.extract_strided_slice %289 {offsets = [2, 0], sizes = [1, 1], strides = [1, 1]} : vector<3x3xf32> to vector<1x1xf32>
      %297 = vector.extract_strided_slice %289 {offsets = [2, 1], sizes = [1, 1], strides = [1, 1]} : vector<3x3xf32> to vector<1x1xf32>
      %298 = vector.extract_strided_slice %289 {offsets = [2, 2], sizes = [1, 1], strides = [1, 1]} : vector<3x3xf32> to vector<1x1xf32>
      %299 = arith.mulf %294, %298 : vector<1x1xf32>
      %300 = arith.mulf %295, %297 : vector<1x1xf32>
      %301 = arith.subf %299, %300 : vector<1x1xf32>
      %302 = arith.mulf %292, %297 : vector<1x1xf32>
      %303 = arith.mulf %291, %298 : vector<1x1xf32>
      %304 = arith.subf %302, %303 : vector<1x1xf32>
      %305 = arith.mulf %291, %295 : vector<1x1xf32>
      %306 = arith.mulf %292, %294 : vector<1x1xf32>
      %307 = arith.subf %305, %306 : vector<1x1xf32>
      %308 = arith.mulf %295, %296 : vector<1x1xf32>
      %309 = arith.mulf %293, %298 : vector<1x1xf32>
      %310 = arith.subf %308, %309 : vector<1x1xf32>
      %311 = arith.mulf %290, %298 : vector<1x1xf32>
      %312 = arith.mulf %292, %296 : vector<1x1xf32>
      %313 = arith.subf %311, %312 : vector<1x1xf32>
      %314 = arith.mulf %292, %293 : vector<1x1xf32>
      %315 = arith.mulf %290, %295 : vector<1x1xf32>
      %316 = arith.subf %314, %315 : vector<1x1xf32>
      %317 = arith.mulf %293, %297 : vector<1x1xf32>
      %318 = arith.mulf %294, %296 : vector<1x1xf32>
      %319 = arith.subf %317, %318 : vector<1x1xf32>
      %320 = arith.mulf %291, %296 : vector<1x1xf32>
      %321 = arith.mulf %290, %297 : vector<1x1xf32>
      %322 = arith.subf %320, %321 : vector<1x1xf32>
      %323 = arith.mulf %290, %294 : vector<1x1xf32>
      %324 = arith.mulf %291, %293 : vector<1x1xf32>
      %325 = arith.subf %323, %324 : vector<1x1xf32>
      %326 = arith.mulf %290, %301 : vector<1x1xf32>
      %327 = arith.mulf %291, %310 : vector<1x1xf32>
      %328 = arith.addf %326, %327 : vector<1x1xf32>
      %329 = arith.mulf %292, %319 : vector<1x1xf32>
      %330 = arith.addf %328, %329 : vector<1x1xf32>
      %cst_131 = arith.constant 1.000000e+00 : f32
      %331 = vector.broadcast %cst_131 : f32 to vector<1x1xf32>
      %332 = arith.divf %331, %330 : vector<1x1xf32>
      %333 = tpu.concatenate %301, %304, %307 in 1 : vector<1x1xf32>, vector<1x1xf32>, vector<1x1xf32> -> vector<1x3xf32>
      %334 = tpu.concatenate %310, %313, %316 in 1 : vector<1x1xf32>, vector<1x1xf32>, vector<1x1xf32> -> vector<1x3xf32>
      %335 = tpu.concatenate %319, %322, %325 in 1 : vector<1x1xf32>, vector<1x1xf32>, vector<1x1xf32> -> vector<1x3xf32>
      %336 = tpu.concatenate %333, %334, %335 in 0 : vector<1x3xf32>, vector<1x3xf32>, vector<1x3xf32> -> vector<3x3xf32>
      %337 = vector.broadcast %332 : vector<1x1xf32> to vector<3x3xf32>
      %338 = arith.mulf %336, %337 : vector<3x3xf32>
      %339 = vector.extract_strided_slice %288 {offsets = [3, 0], sizes = [3, 3], strides = [1, 1]} : vector<6x3xf32> to vector<3x3xf32>
      %340 = vector.extract_strided_slice %339 {offsets = [0, 0], sizes = [1, 1], strides = [1, 1]} : vector<3x3xf32> to vector<1x1xf32>
      %341 = vector.extract_strided_slice %339 {offsets = [0, 1], sizes = [1, 1], strides = [1, 1]} : vector<3x3xf32> to vector<1x1xf32>
      %342 = vector.extract_strided_slice %339 {offsets = [0, 2], sizes = [1, 1], strides = [1, 1]} : vector<3x3xf32> to vector<1x1xf32>
      %343 = vector.extract_strided_slice %339 {offsets = [1, 0], sizes = [1, 1], strides = [1, 1]} : vector<3x3xf32> to vector<1x1xf32>
      %344 = vector.extract_strided_slice %339 {offsets = [1, 1], sizes = [1, 1], strides = [1, 1]} : vector<3x3xf32> to vector<1x1xf32>
      %345 = vector.extract_strided_slice %339 {offsets = [1, 2], sizes = [1, 1], strides = [1, 1]} : vector<3x3xf32> to vector<1x1xf32>
      %346 = vector.extract_strided_slice %339 {offsets = [2, 0], sizes = [1, 1], strides = [1, 1]} : vector<3x3xf32> to vector<1x1xf32>
      %347 = vector.extract_strided_slice %339 {offsets = [2, 1], sizes = [1, 1], strides = [1, 1]} : vector<3x3xf32> to vector<1x1xf32>
      %348 = vector.extract_strided_slice %339 {offsets = [2, 2], sizes = [1, 1], strides = [1, 1]} : vector<3x3xf32> to vector<1x1xf32>
      %349 = arith.mulf %344, %348 : vector<1x1xf32>
      %350 = arith.mulf %345, %347 : vector<1x1xf32>
      %351 = arith.subf %349, %350 : vector<1x1xf32>
      %352 = arith.mulf %342, %347 : vector<1x1xf32>
      %353 = arith.mulf %341, %348 : vector<1x1xf32>
      %354 = arith.subf %352, %353 : vector<1x1xf32>
      %355 = arith.mulf %341, %345 : vector<1x1xf32>
      %356 = arith.mulf %342, %344 : vector<1x1xf32>
      %357 = arith.subf %355, %356 : vector<1x1xf32>
      %358 = arith.mulf %345, %346 : vector<1x1xf32>
      %359 = arith.mulf %343, %348 : vector<1x1xf32>
      %360 = arith.subf %358, %359 : vector<1x1xf32>
      %361 = arith.mulf %340, %348 : vector<1x1xf32>
      %362 = arith.mulf %342, %346 : vector<1x1xf32>
      %363 = arith.subf %361, %362 : vector<1x1xf32>
      %364 = arith.mulf %342, %343 : vector<1x1xf32>
      %365 = arith.mulf %340, %345 : vector<1x1xf32>
      %366 = arith.subf %364, %365 : vector<1x1xf32>
      %367 = arith.mulf %343, %347 : vector<1x1xf32>
      %368 = arith.mulf %344, %346 : vector<1x1xf32>
      %369 = arith.subf %367, %368 : vector<1x1xf32>
      %370 = arith.mulf %341, %346 : vector<1x1xf32>
      %371 = arith.mulf %340, %347 : vector<1x1xf32>
      %372 = arith.subf %370, %371 : vector<1x1xf32>
      %373 = arith.mulf %340, %344 : vector<1x1xf32>
      %374 = arith.mulf %341, %343 : vector<1x1xf32>
      %375 = arith.subf %373, %374 : vector<1x1xf32>
      %376 = arith.mulf %340, %351 : vector<1x1xf32>
      %377 = arith.mulf %341, %360 : vector<1x1xf32>
      %378 = arith.addf %376, %377 : vector<1x1xf32>
      %379 = arith.mulf %342, %369 : vector<1x1xf32>
      %380 = arith.addf %378, %379 : vector<1x1xf32>
      %cst_132 = arith.constant 1.000000e+00 : f32
      %381 = vector.broadcast %cst_132 : f32 to vector<1x1xf32>
      %382 = arith.divf %381, %380 : vector<1x1xf32>
      %383 = tpu.concatenate %351, %354, %357 in 1 : vector<1x1xf32>, vector<1x1xf32>, vector<1x1xf32> -> vector<1x3xf32>
      %384 = tpu.concatenate %360, %363, %366 in 1 : vector<1x1xf32>, vector<1x1xf32>, vector<1x1xf32> -> vector<1x3xf32>
      %385 = tpu.concatenate %369, %372, %375 in 1 : vector<1x1xf32>, vector<1x1xf32>, vector<1x1xf32> -> vector<1x3xf32>
      %386 = tpu.concatenate %383, %384, %385 in 0 : vector<1x3xf32>, vector<1x3xf32>, vector<1x3xf32> -> vector<3x3xf32>
      %387 = vector.broadcast %382 : vector<1x1xf32> to vector<3x3xf32>
      %388 = arith.mulf %386, %387 : vector<3x3xf32>
      %389 = tpu.concatenate %338, %388 in 0 : vector<3x3xf32>, vector<3x3xf32> -> vector<6x3xf32>
      %390 = tpu.concatenate %389, %389 in 1 : vector<6x3xf32>, vector<6x3xf32> -> vector<6x6xf32>
      %391 = arith.mulf %390, %20 : vector<6x6xf32>
      %cst_133 = arith.constant dense<0.000000e+00> : vector<8x6xf32>
      %392 = tpu.matmul %275, %391, %cst_133 {dimension_numbers = #tpu.dot_dimension_numbers<[1], [0], [0], [1], [0, 0, 1, 1], [], []>} : vector<8x6xf32>, vector<6x6xf32>, vector<8x6xf32> -> vector<8x6xf32>
      %393 = tpu.transpose %392, [1, 0] : vector<8x6xf32> -> vector<6x8xf32>
      %cst_134 = arith.constant dense<0.000000e+00> : vector<1x8xf32>
      %394 = tpu.matmul %254, %393, %cst_134 {dimension_numbers = #tpu.dot_dimension_numbers<[1], [0], [0], [1], [0, 0, 1, 1], [], []>} : vector<1x6xf32>, vector<6x8xf32>, vector<1x8xf32> -> vector<1x8xf32>
      %395 = vector.extract_strided_slice %394 {offsets = [0, 0], sizes = [1, 4], strides = [1, 1]} : vector<1x8xf32> to vector<1x4xf32>
      %396 = vector.extract_strided_slice %394 {offsets = [0, 4], sizes = [1, 4], strides = [1, 1]} : vector<1x8xf32> to vector<1x4xf32>
      %397 = tpu.concatenate %395, %396 in 0 : vector<1x4xf32>, vector<1x4xf32> -> vector<2x4xf32>
      %398 = arith.addf %65, %397 : vector<2x4xf32>
      %399 = vector.broadcast %248 : vector<1x6xf32> to vector<8x6xf32>
      %400 = arith.mulf %392, %399 : vector<8x6xf32>
      %cst_135 = arith.constant dense<0.000000e+00> : vector<8x8xf32>
      %401 = tpu.matmul %400, %13, %cst_135 {dimension_numbers = #tpu.dot_dimension_numbers<[1], [0], [0], [1], [0, 0, 1, 1], [], []>} : vector<8x6xf32>, vector<6x8xf32>, vector<8x8xf32> -> vector<8x8xf32>
      %cst_136 = arith.constant dense<0.000000e+00> : vector<8x8xf32>
      %402 = tpu.matmul %401, %272, %cst_136 {dimension_numbers = #tpu.dot_dimension_numbers<[1], [0], [0], [1], [0, 0, 1, 1], [], []>} : vector<8x8xf32>, vector<8x8xf32>, vector<8x8xf32> -> vector<8x8xf32>
      %403 = arith.subf %272, %402 : vector<8x8xf32>
      %c0_137 = arith.constant 0 : index
      %c0_138 = arith.constant 0 : index
      %404 = vector.load %arg23[%c0_137, %c0_138] : memref<2x4xf32, #tpu.memory_space<vmem>>, vector<2x4xf32>
      tpu.vector_store %arg23[%c0_137, %c0_138], %398 {strides = array<i32>} : memref<2x4xf32, #tpu.memory_space<vmem>>, vector<2x4xf32>,
      %c0_139 = arith.constant 0 : index
      %c0_140 = arith.constant 0 : index
      %405 = vector.load %arg24[%c0_139, %c0_140] : memref<8x8xf32, #tpu.memory_space<vmem>>, vector<8x8xf32>
      tpu.vector_store %arg24[%c0_139, %c0_140], %403 {strides = array<i32>} : memref<8x8xf32, #tpu.memory_space<vmem>>, vector<8x8xf32>,
      %406 = arith.index_cast %arg29 : i32 to index
      %c0_141 = arith.constant 0 : index
      %c0_142 = arith.constant 0 : index
      %407 = vector.load %arg22[%406, %c0_141, %c0_142] : memref<8x2x4xf32, #tpu.memory_space<vmem>>, vector<1x2x4xf32>
      %408 = vector.shape_cast %407 : vector<1x2x4xf32> to vector<2x4xf32>
      %409 = vector.shape_cast %398 : vector<2x4xf32> to vector<1x2x4xf32>
      tpu.vector_store %arg22[%406, %c0_141, %c0_142], %409 {strides = array<i32>} : memref<8x2x4xf32, #tpu.memory_space<vmem>>, vector<1x2x4xf32>,
    }
    %c8_i32_36 = arith.constant 8 : i32
    return
  }
  func.func @transform_0(%arg0: i32) -> (i32, i32, i32) {
    %c0_i32 = arith.constant 0 : i32
    %c0_i32_0 = arith.constant 0 : i32
    %c0_i32_1 = arith.constant 0 : i32
    %c0_i32_2 = arith.constant 0 : i32
    return %c0_i32, %c0_i32_0, %c0_i32_1 : i32, i32, i32
  }
  func.func @transform_1(%arg0: i32) -> (i32, i32) {
    %c0_i32 = arith.constant 0 : i32
    %c0_i32_0 = arith.constant 0 : i32
    %c0_i32_1 = arith.constant 0 : i32
    return %c0_i32, %c0_i32_0 : i32, i32
  }
  func.func @transform_2(%arg0: i32) -> (i32, i32) {
    %c0_i32 = arith.constant 0 : i32
    %c0_i32_0 = arith.constant 0 : i32
    %c0_i32_1 = arith.constant 0 : i32
    return %c0_i32, %c0_i32_0 : i32, i32
  }
  func.func @transform_3(%arg0: i32) -> (i32, i32) {
    %c0_i32 = arith.constant 0 : i32
    %c0_i32_0 = arith.constant 0 : i32
    %c0_i32_1 = arith.constant 0 : i32
    return %c0_i32, %c0_i32_0 : i32, i32
  }
  func.func @transform_4(%arg0: i32) -> (i32, i32) {
    %c0_i32 = arith.constant 0 : i32
    %c0_i32_0 = arith.constant 0 : i32
    %c0_i32_1 = arith.constant 0 : i32
    return %c0_i32, %c0_i32_0 : i32, i32
  }
  func.func @transform_5(%arg0: i32) -> (i32, i32) {
    %c0_i32 = arith.constant 0 : i32
    %c0_i32_0 = arith.constant 0 : i32
    %c0_i32_1 = arith.constant 0 : i32
    return %c0_i32, %c0_i32_0 : i32, i32
  }
  func.func @transform_6(%arg0: i32) -> (i32, i32) {
    %c0_i32 = arith.constant 0 : i32
    %c0_i32_0 = arith.constant 0 : i32
    %c0_i32_1 = arith.constant 0 : i32
    return %c0_i32, %c0_i32_0 : i32, i32
  }
  func.func @transform_7(%arg0: i32) -> (i32, i32) {
    %c0_i32 = arith.constant 0 : i32
    %c0_i32_0 = arith.constant 0 : i32
    %c0_i32_1 = arith.constant 0 : i32
    return %c0_i32, %c0_i32_0 : i32, i32
  }
  func.func @transform_8(%arg0: i32) -> (i32, i32) {
    %c0_i32 = arith.constant 0 : i32
    %c0_i32_0 = arith.constant 0 : i32
    %c0_i32_1 = arith.constant 0 : i32
    return %c0_i32, %c0_i32_0 : i32, i32
  }
  func.func @transform_9(%arg0: i32) -> (i32, i32) {
    %c0_i32 = arith.constant 0 : i32
    %c0_i32_0 = arith.constant 0 : i32
    %c0_i32_1 = arith.constant 0 : i32
    return %c0_i32, %c0_i32_0 : i32, i32
  }
  func.func @transform_10(%arg0: i32) -> (i32, i32) {
    %c0_i32 = arith.constant 0 : i32
    %c0_i32_0 = arith.constant 0 : i32
    %c0_i32_1 = arith.constant 0 : i32
    return %c0_i32, %c0_i32_0 : i32, i32
  }
  func.func @transform_11(%arg0: i32) -> (i32, i32) {
    %c0_i32 = arith.constant 0 : i32
    %c0_i32_0 = arith.constant 0 : i32
    %c0_i32_1 = arith.constant 0 : i32
    return %c0_i32, %c0_i32_0 : i32, i32
  }
  func.func @transform_12(%arg0: i32) -> (i32, i32) {
    %c0_i32 = arith.constant 0 : i32
    %c0_i32_0 = arith.constant 0 : i32
    %c0_i32_1 = arith.constant 0 : i32
    return %c0_i32, %c0_i32_0 : i32, i32
  }
  func.func @transform_13(%arg0: i32) -> (i32, i32) {
    %c0_i32 = arith.constant 0 : i32
    %c0_i32_0 = arith.constant 0 : i32
    %c0_i32_1 = arith.constant 0 : i32
    return %c0_i32, %c0_i32_0 : i32, i32
  }
  func.func @transform_14(%arg0: i32) -> (i32, i32) {
    %c0_i32 = arith.constant 0 : i32
    %c0_i32_0 = arith.constant 0 : i32
    %c0_i32_1 = arith.constant 0 : i32
    return %c0_i32, %c0_i32_0 : i32, i32
  }
  func.func @transform_15(%arg0: i32) -> (i32, i32) {
    %c0_i32 = arith.constant 0 : i32
    %c0_i32_0 = arith.constant 0 : i32
    %c0_i32_1 = arith.constant 0 : i32
    return %c0_i32, %c0_i32_0 : i32, i32
  }
  func.func @transform_16(%arg0: i32) -> (i32, i32) {
    %c0_i32 = arith.constant 0 : i32
    %c0_i32_0 = arith.constant 0 : i32
    %c0_i32_1 = arith.constant 0 : i32
    return %c0_i32, %c0_i32_0 : i32, i32
  }
  func.func @transform_17(%arg0: i32) -> (i32, i32) {
    %c0_i32 = arith.constant 0 : i32
    %c0_i32_0 = arith.constant 0 : i32
    %c0_i32_1 = arith.constant 0 : i32
    return %c0_i32, %c0_i32_0 : i32, i32
  }
  func.func @transform_18(%arg0: i32) -> (i32, i32) {
    %c0_i32 = arith.constant 0 : i32
    %c0_i32_0 = arith.constant 0 : i32
    %c0_i32_1 = arith.constant 0 : i32
    return %c0_i32, %c0_i32_0 : i32, i32
  }
  func.func @transform_19(%arg0: i32) -> (i32, i32) {
    %c0_i32 = arith.constant 0 : i32
    %c0_i32_0 = arith.constant 0 : i32
    %c0_i32_1 = arith.constant 0 : i32
    return %c0_i32, %c0_i32_0 : i32, i32
  }
  func.func @transform_20(%arg0: i32) -> (i32, i32, i32) {
    %c0_i32 = arith.constant 0 : i32
    %c0_i32_0 = arith.constant 0 : i32
    %c0_i32_1 = arith.constant 0 : i32
    %c0_i32_2 = arith.constant 0 : i32
    return %c0_i32, %c0_i32_0, %c0_i32_1 : i32, i32, i32
  }
  func.func @transform_21(%arg0: i32) -> (i32, i32, i32) {
    %c0_i32 = arith.constant 0 : i32
    %c0_i32_0 = arith.constant 0 : i32
    %c0_i32_1 = arith.constant 0 : i32
    %c0_i32_2 = arith.constant 0 : i32
    return %c0_i32, %c0_i32_0, %c0_i32_1 : i32, i32, i32
  }
}

</mosaic_0001>

<llo_original>
// kernel: tpu_custom_call.1
$region0: #{tpu_custom_call.1}
  #allocation0 [shape = 'u32[]', space=smem, size = 0x4, offset = 0x4, fixed_abs, tag = 'smem constant byte address 0x4 - core index']
  #allocation1 [shape = 'u32[144,128]{1,0:T(1,128)}', space=vmem, size = 0x12000, scoped, tag = 'internal scratch']
  #allocation2 [shape = 'f32[2,4]{1,0:T(2,128)}', space=vmem, size = 0x400, scoped, tag = 'scratch operand']
  #allocation3 [shape = 'f32[8,8]{1,0:T(8,128)}', space=vmem, size = 0x1000, scoped, tag = 'scratch operand']
  #allocation4 [shape = 'f32[2,32]{1,0:T(2,128)}', space=vmem, size = 0x400, scoped, tag = 'scratch operand']
  #allocation5 [shape = 'f32[2,32]{1,0:T(2,128)}', space=vmem, size = 0x400, scoped, tag = 'scratch operand']
  #allocation6 [shape = 'f32[2,96]{1,0:T(2,128)}', space=vmem, size = 0x400, scoped, tag = 'scratch operand']
  #allocation7 [shape = 'f32[2,96]{1,0:T(2,128)}', space=vmem, size = 0x400, scoped, tag = 'scratch operand']
  %s0 = inlined_call_operand.vmem [shape: f32[8,2,3], index: 0, kind: input, shape index: {}]
  %s1 = inlined_call_operand.vmem [shape: f32[2,4], index: 1, kind: input, shape index: {}]
  %s2 = inlined_call_operand.vmem [shape: f32[8,8], index: 2, kind: input, shape index: {}]
  %s3 = inlined_call_operand.vmem [shape: f32[36,128], index: 3, kind: input, shape index: {}]
  %s4 = inlined_call_operand.vmem [shape: f32[1,128], index: 4, kind: input, shape index: {}]
  %s5 = inlined_call_operand.vmem [shape: f32[32,4], index: 5, kind: input, shape index: {}]
  %s6 = inlined_call_operand.vmem [shape: f32[1,4], index: 6, kind: input, shape index: {}]
  %s7 = inlined_call_operand.hbm [shape: f32[100,384], index: 7, kind: input, shape index: {}]
  %s8 = inlined_call_operand.vmem [shape: f32[1,384], index: 8, kind: input, shape index: {}]
  %s9 = inlined_call_operand.vmem [shape: f32[96,23], index: 9, kind: input, shape index: {}]
  %s10 = inlined_call_operand.vmem [shape: f32[1,23], index: 10, kind: input, shape index: {}]
  %s11 = inlined_call_operand.vmem [shape: f32[4,3], index: 11, kind: input, shape index: {}]
  %s12 = inlined_call_operand.vmem [shape: f32[6,8], index: 12, kind: input, shape index: {}]
  %s13 = inlined_call_operand.vmem [shape: f32[8,6], index: 13, kind: input, shape index: {}]
  %s14 = inlined_call_operand.vmem [shape: f32[1,3], index: 14, kind: input, shape index: {}]
  %s15 = inlined_call_operand.vmem [shape: f32[1,3], index: 15, kind: input, shape index: {}]
  %s16 = inlined_call_operand.vmem [shape: f32[8,8], index: 16, kind: input, shape index: {}]
  %s17 = inlined_call_operand.vmem [shape: f32[6,6], index: 17, kind: input, shape index: {}]
  %s18 = inlined_call_operand.vmem [shape: f32[8,8], index: 18, kind: input, shape index: {}]
  %s19 = inlined_call_operand.vmem [shape: f32[6,6], index: 19, kind: input, shape index: {}]
  %s20 = inlined_call_operand.vmem [shape: f32[8,2,4], index: 20, kind: output, shape index: {0}]
  %s21 = inlined_call_operand.vmem [shape: f32[8,2,4], index: 21, kind: output, shape index: {1}]
  %22 = xla_tuple %s20, %s21
  %s23 = sld [smem:[#allocation0]]
  $region109: #{tpu_custom_call.1} parent=0
    _
  %s25 = ssub.s32 1, %s23
  %s26 = scalar_select 0, %s25, %s23
  $region1: #{tpu_custom_call.1} parent=0
    #allocation8 [shape = 'u8[159744]{0}', space=vmem, size = 0x27000, scoped, tag = 'input window, operand 7, single buffered']
    #allocation9 [shape = 's32[1]{0}', space=sflag, size = 0x4, scoped, tag = 'scoped memory for tpu_custom_call.1']
    %27 = vsyncpa [#allocation9], 0
    // Predicated region
    $region2: #{tpu_custom_call.1} parent=1 // pred_check
      _
    $region3: #{tpu_custom_call.1} parent=1 // pred_check_branch
      %29 = sbr.rel (0) target = $region5
    $region4: #{tpu_custom_call.1} parent=1 // pred_region
      _
    $region5: #{tpu_custom_call.1} parent=1 // pred_fallthru
      _
    // Predicated region
    $region6: #{tpu_custom_call.1} parent=1 // pred_check
      _
    $region7: #{tpu_custom_call.1} parent=1 // pred_check_branch
      %31 = sbr.rel (0) target = $region9
    $region8: #{tpu_custom_call.1} parent=1 // pred_region
      _
    $region9: #{tpu_custom_call.1} parent=1 // pred_fallthru
      _
    // Predicated region
    $region10: #{tpu_custom_call.1} parent=1 // pred_check
      _
    $region11: #{tpu_custom_call.1} parent=1 // pred_check_branch
      %33 = sbr.rel (0) target = $region13
    $region12: #{tpu_custom_call.1} parent=1 // pred_region
      _
    $region13: #{tpu_custom_call.1} parent=1 // pred_fallthru
      _
    // Predicated region
    $region14: #{tpu_custom_call.1} parent=1 // pred_check
      _
    $region15: #{tpu_custom_call.1} parent=1 // pred_check_branch
      %35 = sbr.rel (0) target = $region17
    $region16: #{tpu_custom_call.1} parent=1 // pred_region
      _
    $region17: #{tpu_custom_call.1} parent=1 // pred_fallthru
      _
    // Predicated region
    $region18: #{tpu_custom_call.1} parent=1 // pred_check
      _
    $region19: #{tpu_custom_call.1} parent=1 // pred_check_branch
      %37 = sbr.rel (0) target = $region21
    $region20: #{tpu_custom_call.1} parent=1 // pred_region
      _
    $region21: #{tpu_custom_call.1} parent=1 // pred_fallthru
      _
    // Predicated region
    $region22: #{tpu_custom_call.1} parent=1 // pred_check
      _
    $region23: #{tpu_custom_call.1} parent=1 // pred_check_branch
      %39 = sbr.rel (0) target = $region25
    $region24: #{tpu_custom_call.1} parent=1 // pred_region
      _
    $region25: #{tpu_custom_call.1} parent=1 // pred_fallthru
      _
    // Predicated region
    $region26: #{tpu_custom_call.1} parent=1 // pred_check
      _
    $region27: #{tpu_custom_call.1} parent=1 // pred_check_branch
      %41 = sbr.rel (0) target = $region29
    $region28: #{tpu_custom_call.1} parent=1 // pred_region
      _
    $region29: #{tpu_custom_call.1} parent=1 // pred_fallthru
      _
    // Predicated region
    $region30: #{tpu_custom_call.1} parent=1 // pred_check
      _
    $region31: #{tpu_custom_call.1} parent=1 // pred_check_branch
      %43 = sbr.rel (0) target = $region33
    $region32: #{tpu_custom_call.1} parent=1 // pred_region
      %s45 = ssub.s32 4992, 4992
      %46 = vsyncadd [#allocation9], %s45
      %s47 = sshll.u32 [#allocation8], 4
      %s48 = int_to_ptr.vmem [resolvable:$true] %s47
      %53 = dma.hbm_to_vmem [thread:$0]  %s7, 4992, %s48, [#allocation9], 384, 384, 24
    $region33: #{tpu_custom_call.1} parent=1 // pred_fallthru
      _
    // Predicated region
    $region34: #{tpu_custom_call.1} parent=1 // pred_check
      _
    $region35: #{tpu_custom_call.1} parent=1 // pred_check_branch
      %55 = sbr.rel (0) target = $region37
    $region36: #{tpu_custom_call.1} parent=1 // pred_region
      _
    $region37: #{tpu_custom_call.1} parent=1 // pred_fallthru
      _
    // Predicated region
    $region38: #{tpu_custom_call.1} parent=1 // pred_check
      _
    $region39: #{tpu_custom_call.1} parent=1 // pred_check_branch
      %57 = sbr.rel (0) target = $region41
    $region40: #{tpu_custom_call.1} parent=1 // pred_region
      _
    $region41: #{tpu_custom_call.1} parent=1 // pred_fallthru
      _
    // Predicated region
    $region42: #{tpu_custom_call.1} parent=1 // pred_check
      _
    $region43: #{tpu_custom_call.1} parent=1 // pred_check_branch
      %59 = sbr.rel (0) target = $region45
    $region44: #{tpu_custom_call.1} parent=1 // pred_region
      _
    $region45: #{tpu_custom_call.1} parent=1 // pred_fallthru
      _
    // Predicated region
    $region46: #{tpu_custom_call.1} parent=1 // pred_check
      _
    $region47: #{tpu_custom_call.1} parent=1 // pred_check_branch
      %61 = sbr.rel (0) target = $region49
    $region48: #{tpu_custom_call.1} parent=1 // pred_region
      _
    $region49: #{tpu_custom_call.1} parent=1 // pred_fallthru
      _
    // Predicated region
    $region50: #{tpu_custom_call.1} parent=1 // pred_check
      _
    $region51: #{tpu_custom_call.1} parent=1 // pred_check_branch
      %63 = sbr.rel (0) target = $region53
    $region52: #{tpu_custom_call.1} parent=1 // pred_region
      _
    $region53: #{tpu_custom_call.1} parent=1 // pred_fallthru
      _
    // Predicated region
    $region54: #{tpu_custom_call.1} parent=1 // pred_check
      _
    $region55: #{tpu_custom_call.1} parent=1 // pred_check_branch
      %65 = sbr.rel (0) target = $region57
    $region56: #{tpu_custom_call.1} parent=1 // pred_region
      _
    $region57: #{tpu_custom_call.1} parent=1 // pred_fallthru
      _
    // Predicated region
    $region58: #{tpu_custom_call.1} parent=1 // pred_check
      _
    $region59: #{tpu_custom_call.1} parent=1 // pred_check_branch
      %67 = sbr.rel (0) target = $region61
    $region60: #{tpu_custom_call.1} parent=1 // pred_region
      _
    $region61: #{tpu_custom_call.1} parent=1 // pred_fallthru
      _
    // Predicated region
    $region62: #{tpu_custom_call.1} parent=1 // pred_check
      _
    $region63: #{tpu_custom_call.1} parent=1 // pred_check_branch
      %69 = sbr.rel (0) target = $region65
    $region64: #{tpu_custom_call.1} parent=1 // pred_region
      _
    $region65: #{tpu_custom_call.1} parent=1 // pred_fallthru
      _
    // Predicated region
    $region66: #{tpu_custom_call.1} parent=1 // pred_check
      _
    $region67: #{tpu_custom_call.1} parent=1 // pred_check_branch
      %71 = sbr.rel (0) target = $region69
    $region68: #{tpu_custom_call.1} parent=1 // pred_region
      _
    $region69: #{tpu_custom_call.1} parent=1 // pred_fallthru
      _
    // Predicated region
    $region70: #{tpu_custom_call.1} parent=1 // pred_check
      _
    $region71: #{tpu_custom_call.1} parent=1 // pred_check_branch
      %73 = sbr.rel (0) target = $region73
    $region72: #{tpu_custom_call.1} parent=1 // pred_region
      _
    $region73: #{tpu_custom_call.1} parent=1 // pred_fallthru
      _
    // Predicated region
    $region74: #{tpu_custom_call.1} parent=1 // pred_check
      _
    $region75: #{tpu_custom_call.1} parent=1 // pred_check_branch
      %75 = sbr.rel (0) target = $region77
    $region76: #{tpu_custom_call.1} parent=1 // pred_region
      _
    $region77: #{tpu_custom_call.1} parent=1 // pred_fallthru
      _
    // Predicated region
    $region78: #{tpu_custom_call.1} parent=1 // pred_check
      _
    $region79: #{tpu_custom_call.1} parent=1 // pred_check_branch
      %77 = sbr.rel (0) target = $region81
    $region80: #{tpu_custom_call.1} parent=1 // pred_region
      _
    $region81: #{tpu_custom_call.1} parent=1 // pred_fallthru
      _
    // Predicated region
    $region82: #{tpu_custom_call.1} parent=1 // pred_check
      _
    $region83: #{tpu_custom_call.1} parent=1 // pred_check_branch
      %79 = sbr.rel (0) target = $region85
    $region84: #{tpu_custom_call.1} parent=1 // pred_region
      %80 = dma.done [#allocation9], 4992
    $region85: #{tpu_custom_call.1} parent=1 // pred_fallthru
      _
    %v81 = vld [vmem:[%s1] sm:$0x3]
    %vm82 = vcmask 25600
    %83 = vst.msk [vmem:[#allocation2] sm:$0x3] %vm82, %v81
    %v84 = vld [vmem:[%s2] sm:$0xff]
    %vm85 = vcmask 64512
    %86 = vst.msk [vmem:[#allocation3] sm:$0xff] %vm85, %v84
    %vm87 = vcmask 254976
    %88 = vst.msk [vmem:[#allocation4] sm:$0x3] %vm87, 0.0
    %89 = vst.msk [vmem:[#allocation5] sm:$0x3] %vm87, 0.0
    %vm90 = vcmask 779264
    %91 = vst.msk [vmem:[#allocation6] sm:$0x3] %vm90, 0.0
    %92 = vst.msk [vmem:[#allocation7] sm:$0x3] %vm90, 0.0
    %v93 = vld [vmem:[%s11] sm:$0xf]
    %v94 = vld [vmem:[%s12] sm:$0x3f]
    %v95 = vld [vmem:[%s13] sm:$0xff]
    %v96 = vld [vmem:[%s14] sm:$0x1]
    %v97 = vld [vmem:[%s15] sm:$0x1]
    %v98 = vld [vmem:[%s16] sm:$0xff]
    %v99 = vld [vmem:[%s17] sm:$0x3f]
    %v100 = vld [vmem:[%s18] sm:$0xff]
    %v101 = vld [vmem:[%s19] sm:$0x3f]
    loop: start=0, step=1, limit=8
    $region86: #{tpu_custom_call.1} parent=1 // loop_pre_header
      _
    $region87: #{tpu_custom_call.1} parent=1 // loop_header
      %s103 = sphi 0, %s107
      %p104 = scmp.ge.s32.totalorder %s103, 8
    $region88: #{tpu_custom_call.1} parent=1 // loop_header_branch
      %106 = sbr.rel (%p104) target = $region92
    $region89: #{tpu_custom_call.1} parent=1 // loop_body
      %s108 = smul.u32 %s103, 2
      %s109 = scalar_lea.vmem %s0, %s108
      %v110 = vld [vmem:[%s109] sm:$0x3]
      %v111 = vld [vmem:[#allocation2] sm:$0x3]
      %v112 = vld [vmem:[#allocation4] sm:$0x3]
      %114 = vrot.lane.b32.xlu0 %v112, 4
      %v115 = vpop.permute.xlu0 %114
      %vm117 = vcmask 31744
      %v118 = vsel %vm117, %v111, %v115
      %v119 = vld [vmem:[%s3] sm:$0xff]
      %v120 = vld [vmem:[%s3 + $0x8] sm:$0xff]
      %v121 = vld [vmem:[%s3 + $0x10] sm:$0xff]
      %v122 = vld [vmem:[%s3 + $0x18] sm:$0xff]
      %v123 = vld [vmem:[%s3 + $0x20] sm:$0xf]
      %v124 = vld [vmem:[%s4] sm:$0x1]
      %v126 = vlaneseq
      %v127 = vshrl.u32 %v126, 7
      %v128 = vsub.s32 0, %v127
      %v129 = vrot.slane %v124, %v128
      %vm131 = vcmask 293888
      %v133 = vsel %vm131, %v118, 0
      %vm135 = vcmask 1043456
      %v137 = vsel %vm135, %v123, 0
      %139 = vmatprep.subr.mxu0 0.0
      %140 = vmatpush1.msra.mxu0 %v119
      %141 = vmatprep.subr.mxu0 0.0
      %142 = vmatpush1.msra.mxu0 %v120
      %143 = vmatprep.subr.mxu0 0.0
      %144 = vmatpush1.msra.mxu0 %v121
      %145 = vmatprep.subr.mxu0 0.0
      %146 = vmatpush1.msra.mxu0 %v122
      %147 = vmatprep.subr.mxu0 0.0
      %148 = vmatpush1.msra.mxu0 %v137
      %149 = vmatprep.subr.mxu0 0.0
      %150 = vmatpush1.msra.mxu0 0.0
      %151 = vmatprep.subr.mxu0 0.0
      %152 = vmatpush1.msra.mxu0 0.0
      %153 = vmatprep.subr.mxu0 0.0
      %154 = vmatpush1.msra.mxu0 0.0
      %155 = vmatprep.subr.mxu0 0.0
      %156 = vmatpush1.msra.mxu0 0.0
      %157 = vmatprep.subr.mxu0 0.0
      %158 = vmatpush1.msra.mxu0 0.0
      %159 = vmatprep.subr.mxu0 0.0
      %160 = vmatpush1.msra.mxu0 0.0
      %161 = vmatprep.subr.mxu0 0.0
      %162 = vmatpush1.msra.mxu0 0.0
      %163 = vmatprep.subr.mxu0 0.0
      %164 = vmatpush1.msra.mxu0 0.0
      %165 = vmatprep.subr.mxu0 0.0
      %166 = vmatpush1.msra.mxu0 0.0
      %167 = vmatprep.subr.mxu0 0.0
      %168 = vmatpush1.msra.mxu0 0.0
      %169 = vmatprep.subr.mxu0 0.0
      %170 = vmatpush1.msra.mxu0 0.0
      %171 = vmatprep.subr.mxu0 0.0
      %172 = vmatpush1.msra.mxu0 0.0
      %173 = vmatprep.subr.mxu0 0.0
      %174 = vmatpush1.msra.mxu0 0.0
      %175 = vmatprep.subr.mxu0 0.0
      %176 = vmatpush1.msra.mxu0 0.0
      %177 = vmatprep.subr.mxu0 0.0
      %178 = vmatpush1.msra.mxu0 0.0
      %179 = vmatprep.subr.mxu0 0.0
      %180 = vmatpush1.msra.mxu0 0.0
      %181 = vmatprep.subr.mxu0 0.0
      %182 = vmatpush1.msra.mxu0 0.0
      %183 = vmatprep.subr.mxu0 0.0
      %184 = vmatpush1.msra.mxu0 0.0
      %185 = vmatprep.subr.mxu0 0.0
      %186 = vmatpush1.msra.mxu0 0.0
      %187 = vmatprep.subr.mxu0 0.0
      %188 = vmatpush1.msra.mxu0 0.0
      %189 = vmatprep.subr.mxu0 0.0
      %190 = vmatpush1.msra.mxu0 0.0
      %191 = vmatprep.subr.mxu0 0.0
      %192 = vmatpush1.msra.mxu0 0.0
      %193 = vmatprep.subr.mxu0 0.0
      %194 = vmatpush1.msra.mxu0 0.0
      %195 = vmatprep.subr.mxu0 0.0
      %196 = vmatpush1.msra.mxu0 0.0
      %197 = vmatprep.subr.mxu0 0.0
      %198 = vmatpush1.msra.mxu0 0.0
      %199 = vmatprep.subr.mxu0 0.0
      %200 = vmatpush1.msra.mxu0 0.0
      %201 = vmatprep.subr.mxu0 0.0
      %202 = vmatpush1.msra.mxu0 0.0
      %203 = vmatprep.mubr.f32.mxu0 0.0
      %204 = vmatmul.mubr.f32.gmra.mrb[0].mxu0 %v133
      %v205 = vpop.f32.mrb[0].mxu0
      %v206 = vadd.f32 %v129, %v205
      %v207 = vpop.f32.mrb[0].mxu0
      %208 = vdwg.mxu0
      %v209 = vxor.u32 %v206, 2147483648
      %v210 = vmul.f32 %v209, 1.442695
      %v211 = vpow.pop %v210
      %v212 = vadd.f32 %v211, 1.0
      %v213 = vrcp.pop %v212
      %v214 = vmul.f32 1.0, %v213
      %v215 = vtanh.pop %v206
      %v216 = vld [vmem:[#allocation5] sm:$0x3]
      %218 = vrot.lane.b32.xlu0 %v216, 32
      %v219 = vpop.permute.xlu0 %218
      %v221 = vmul.f32 %v214, %v219
      %223 = vrot.lane.b32.xlu0 %v215, 64
      %v224 = vpop.permute.xlu0 %223
      %v226 = vmul.f32 %v214, %v224
      %228 = vrot.lane.b32.xlu0 %v226, 32
      %v229 = vpop.permute.xlu0 %228
      %v231 = vadd.f32 %v221, %v229
      %v232 = vtanh.pop %v231
      %234 = vrot.lane.b32.xlu0 %v232, 64
      %v235 = vpop.permute.xlu0 %234
      %v237 = vmul.f32 %v214, %v235
      %239 = vrot.lane.b32.xlu0 %v237, 32
      %v240 = vpop.permute.xlu0 %239
      %242 = vst.msk [vmem:[#allocation4] sm:$0x3] %vm87, %v240
      %244 = vrot.lane.b32.xlu0 %v231, 96
      %v245 = vpop.permute.xlu0 %244
      %247 = vst.msk [vmem:[#allocation5] sm:$0x3] %vm87, %v245
      %v248 = vld [vmem:[%s5] sm:$0xff]
      %v249 = vld [vmem:[%s5 + $0x8] sm:$0xff]
      %v250 = vld [vmem:[%s5 + $0x10] sm:$0xff]
      %v251 = vld [vmem:[%s5 + $0x18] sm:$0xff]
      %v252 = vld [vmem:[%s6] sm:$0x1]
      %v254 = vlaneseq
      %v255 = vshrl.u32 %v254, 7
      %v256 = vsub.s32 0, %v255
      %v257 = vrot.slane %v252, %v256
      %vm259 = vcmask 261120
      %v260 = vsel %vm259, %v240, 0
      %262 = vmatprep.subr.mxu0 0.0
      %263 = vmatpush1.msra.mxu0 %v248
      %264 = vmatprep.subr.mxu0 0.0
      %265 = vmatpush1.msra.mxu0 %v249
      %266 = vmatprep.subr.mxu0 0.0
      %267 = vmatpush1.msra.mxu0 %v250
      %268 = vmatprep.subr.mxu0 0.0
      %269 = vmatpush1.msra.mxu0 %v251
      %270 = vmatprep.subr.mxu0 0.0
      %271 = vmatpush1.msra.mxu0 0.0
      %272 = vmatprep.subr.mxu0 0.0
      %273 = vmatpush1.msra.mxu0 0.0
      %274 = vmatprep.subr.mxu0 0.0
      %275 = vmatpush1.msra.mxu0 0.0
      %276 = vmatprep.subr.mxu0 0.0
      %277 = vmatpush1.msra.mxu0 0.0
      %278 = vmatprep.subr.mxu0 0.0
      %279 = vmatpush1.msra.mxu0 0.0
      %280 = vmatprep.subr.mxu0 0.0
      %281 = vmatpush1.msra.mxu0 0.0
      %282 = vmatprep.subr.mxu0 0.0
      %283 = vmatpush1.msra.mxu0 0.0
      %284 = vmatprep.subr.mxu0 0.0
      %285 = vmatpush1.msra.mxu0 0.0
      %286 = vmatprep.subr.mxu0 0.0
      %287 = vmatpush1.msra.mxu0 0.0
      %288 = vmatprep.subr.mxu0 0.0
      %289 = vmatpush1.msra.mxu0 0.0
      %290 = vmatprep.subr.mxu0 0.0
      %291 = vmatpush1.msra.mxu0 0.0
      %292 = vmatprep.subr.mxu0 0.0
      %293 = vmatpush1.msra.mxu0 0.0
      %294 = vmatprep.subr.mxu0 0.0
      %295 = vmatpush1.msra.mxu0 0.0
      %296 = vmatprep.subr.mxu0 0.0
      %297 = vmatpush1.msra.mxu0 0.0
      %298 = vmatprep.subr.mxu0 0.0
      %299 = vmatpush1.msra.mxu0 0.0
      %300 = vmatprep.subr.mxu0 0.0
      %301 = vmatpush1.msra.mxu0 0.0
      %302 = vmatprep.subr.mxu0 0.0
      %303 = vmatpush1.msra.mxu0 0.0
      %304 = vmatprep.subr.mxu0 0.0
      %305 = vmatpush1.msra.mxu0 0.0
      %306 = vmatprep.subr.mxu0 0.0
      %307 = vmatpush1.msra.mxu0 0.0
      %308 = vmatprep.subr.mxu0 0.0
      %309 = vmatpush1.msra.mxu0 0.0
      %310 = vmatprep.subr.mxu0 0.0
      %311 = vmatpush1.msra.mxu0 0.0
      %312 = vmatprep.subr.mxu0 0.0
      %313 = vmatpush1.msra.mxu0 0.0
      %314 = vmatprep.subr.mxu0 0.0
      %315 = vmatpush1.msra.mxu0 0.0
      %316 = vmatprep.subr.mxu0 0.0
      %317 = vmatpush1.msra.mxu0 0.0
      %318 = vmatprep.subr.mxu0 0.0
      %319 = vmatpush1.msra.mxu0 0.0
      %320 = vmatprep.subr.mxu0 0.0
      %321 = vmatpush1.msra.mxu0 0.0
      %322 = vmatprep.subr.mxu0 0.0
      %323 = vmatpush1.msra.mxu0 0.0
      %324 = vmatprep.subr.mxu0 0.0
      %325 = vmatpush1.msra.mxu0 0.0
      %326 = vmatprep.mubr.f32.mxu0 0.0
      %327 = vmatmul.mubr.f32.gmra.mrb[0].mxu0 %v260
      %v328 = vpop.f32.mrb[0].mxu0
      %v329 = vadd.f32 %v257, %v328
      %v330 = vpop.f32.mrb[0].mxu0
      %331 = vdwg.mxu0
      %s332 = scalar_lea.vmem %s20, %s108
      %333 = vst.msk [vmem:[%s332] sm:$0x3] %vm82, %v329
      %v334 = vld [vmem:[#allocation6] sm:$0x3]
      %336 = vrot.lane.b32.xlu0 %v334, 4
      %v337 = vpop.permute.xlu0 %336
      %v339 = vsel %vm117, %v329, %v337
      %v340 = vld [vmem:[#allocation8] sm:$0xff]
      %v341 = vld [vmem:[#allocation8 + $0x8] sm:$0xff]
      %v342 = vld [vmem:[#allocation8 + $0x10] sm:$0xff]
      %v343 = vld [vmem:[#allocation8 + $0x18] sm:$0xff]
      %v344 = vld [vmem:[#allocation8 + $0x20] sm:$0xff]
      %v345 = vld [vmem:[#allocation8 + $0x28] sm:$0xff]
      %v346 = vld [vmem:[#allocation8 + $0x30] sm:$0xff]
      %v347 = vld [vmem:[#allocation8 + $0x38] sm:$0xff]
      %v348 = vld [vmem:[#allocation8 + $0x40] sm:$0xff]
      %v349 = vld [vmem:[#allocation8 + $0x48] sm:$0xff]
      %v350 = vld [vmem:[#allocation8 + $0x50] sm:$0xff]
      %v351 = vld [vmem:[#allocation8 + $0x58] sm:$0xff]
      %v352 = vld [vmem:[#allocation8 + $0x60] sm:$0xff]
      %v353 = vld [vmem:[#allocation8 + $0x68] sm:$0xff]
      %v354 = vld [vmem:[#allocation8 + $0x70] sm:$0xff]
      %v355 = vld [vmem:[#allocation8 + $0x78] sm:$0xff]
      %v356 = vld [vmem:[#allocation8 + $0x80] sm:$0xff]
      %v357 = vld [vmem:[#allocation8 + $0x88] sm:$0xff]
      %v358 = vld [vmem:[#allocation8 + $0x90] sm:$0xff]
      %v359 = vld [vmem:[#allocation8 + $0x98] sm:$0xff]
      %v360 = vld [vmem:[#allocation8 + $0xa0] sm:$0xff]
      %v361 = vld [vmem:[#allocation8 + $0xa8] sm:$0xff]
      %v362 = vld [vmem:[#allocation8 + $0xb0] sm:$0xff]
      %v363 = vld [vmem:[#allocation8 + $0xb8] sm:$0xff]
      %v364 = vld [vmem:[#allocation8 + $0xc0] sm:$0xff]
      %v365 = vld [vmem:[#allocation8 + $0xc8] sm:$0xff]
      %v366 = vld [vmem:[#allocation8 + $0xd0] sm:$0xff]
      %v367 = vld [vmem:[#allocation8 + $0xd8] sm:$0xff]
      %v368 = vld [vmem:[#allocation8 + $0xe0] sm:$0xff]
      %v369 = vld [vmem:[#allocation8 + $0xe8] sm:$0xff]
      %v370 = vld [vmem:[#allocation8 + $0xf0] sm:$0xff]
      %v371 = vld [vmem:[#allocation8 + $0xf8] sm:$0xff]
      %v372 = vld [vmem:[#allocation8 + $0x100] sm:$0xff]
      %v373 = vld [vmem:[#allocation8 + $0x108] sm:$0xff]
      %v374 = vld [vmem:[#allocation8 + $0x110] sm:$0xff]
      %v375 = vld [vmem:[#allocation8 + $0x118] sm:$0xff]
      %v376 = vld [vmem:[#allocation8 + $0x120] sm:$0xf]
      %v377 = vld [vmem:[#allocation8 + $0x128] sm:$0xf]
      %v378 = vld [vmem:[#allocation8 + $0x130] sm:$0xf]
      %v379 = vld [vmem:[%s8] sm:$0x7]
      %v381 = vlaneseq
      %v382 = vshrl.u32 %v381, 7
      %v383 = vsub.s32 0, %v382
      %v384 = vrot.slane %v379, %v383
      %v385 = vlaneseq
      %v386 = vshrl.u32 %v385, 7
      %v387 = vsub.s32 1, %v386
      %v388 = vrot.slane %v379, %v387
      %v389 = vlaneseq
      %v390 = vshrl.u32 %v389, 7
      %v391 = vsub.s32 2, %v390
      %v392 = vrot.slane %v379, %v391
      %vm396 = vcmask 818176
      %v398 = vsel %vm396, %v339, 0
      %v401 = vsel %vm135, %v376, 0
      %v404 = vsel %vm135, %v377, 0
      %v407 = vsel %vm135, %v378, 0
      %409 = vmatprep.subr.mxu0 %v341
      %410 = vmatpush1.msra.mxu0 %v340
      %411 = vmatprep.subr.mxu0 %v344
      %412 = vmatpush1.msra.mxu0 %v343
      %413 = vmatprep.subr.mxu0 %v347
      %414 = vmatpush1.msra.mxu0 %v346
      %415 = vmatprep.subr.mxu0 %v350
      %416 = vmatpush1.msra.mxu0 %v349
      %417 = vmatprep.subr.mxu0 %v353
      %418 = vmatpush1.msra.mxu0 %v352
      %419 = vmatprep.subr.mxu0 %v356
      %420 = vmatpush1.msra.mxu0 %v355
      %421 = vmatprep.subr.mxu0 %v359
      %422 = vmatpush1.msra.mxu0 %v358
      %423 = vmatprep.subr.mxu0 %v362
      %424 = vmatpush1.msra.mxu0 %v361
      %425 = vmatprep.subr.mxu0 %v365
      %426 = vmatpush1.msra.mxu0 %v364
      %427 = vmatprep.subr.mxu0 %v368
      %428 = vmatpush1.msra.mxu0 %v367
      %429 = vmatprep.subr.mxu0 %v371
      %430 = vmatpush1.msra.mxu0 %v370
      %431 = vmatprep.subr.mxu0 %v374
      %432 = vmatpush1.msra.mxu0 %v373
      %433 = vmatprep.subr.mxu0 %v404
      %434 = vmatpush1.msra.mxu0 %v401
      %435 = vmatprep.subr.mxu0 0.0
      %436 = vmatpush1.msra.mxu0 0.0
      %437 = vmatprep.subr.mxu0 0.0
      %438 = vmatpush1.msra.mxu0 0.0
      %439 = vmatprep.subr.mxu0 0.0
      %440 = vmatpush1.msra.mxu0 0.0
      %441 = vmatprep.subr.mxu0 0.0
      %442 = vmatpush1.msra.mxu0 0.0
      %443 = vmatprep.subr.mxu0 0.0
      %444 = vmatpush1.msra.mxu0 0.0
      %445 = vmatprep.subr.mxu0 0.0
      %446 = vmatpush1.msra.mxu0 0.0
      %447 = vmatprep.subr.mxu0 0.0
      %448 = vmatpush1.msra.mxu0 0.0
      %449 = vmatprep.subr.mxu0 0.0
      %450 = vmatpush1.msra.mxu0 0.0
      %451 = vmatprep.subr.mxu0 0.0
      %452 = vmatpush1.msra.mxu0 0.0
      %453 = vmatprep.subr.mxu0 0.0
      %454 = vmatpush1.msra.mxu0 0.0
      %455 = vmatprep.subr.mxu0 0.0
      %456 = vmatpush1.msra.mxu0 0.0
      %457 = vmatprep.subr.mxu0 0.0
      %458 = vmatpush1.msra.mxu0 0.0
      %459 = vmatprep.subr.mxu0 0.0
      %460 = vmatpush1.msra.mxu0 0.0
      %461 = vmatprep.subr.mxu0 0.0
      %462 = vmatpush1.msra.mxu0 0.0
      %463 = vmatprep.subr.mxu0 0.0
      %464 = vmatpush1.msra.mxu0 0.0
      %465 = vmatprep.subr.mxu0 0.0
      %466 = vmatpush1.msra.mxu0 0.0
      %467 = vmatprep.subr.mxu0 0.0
      %468 = vmatpush1.msra.mxu0 0.0
      %469 = vmatprep.subr.mxu0 0.0
      %470 = vmatpush1.msra.mxu0 0.0
      %471 = vmatprep.subr.mxu0 0.0
      %472 = vmatpush1.msra.mxu0 0.0
      %473 = vmatprep.mubr.f32.mxu0 0.0
      %474 = vmatmul.mubr.f32.gmra.mrb[0].mxu0 %v398
      %v475 = vpop.f32.mrb[0].mxu0
      %v476 = vadd.f32 %v384, %v475
      %v477 = vpop.f32.mrb[0].mxu0
      %v478 = vadd.f32 %v388, %v477
      %479 = vdwg.mxu0
      %480 = vmatprep.subr.mxu0 0.0
      %481 = vmatpush1.msra.mxu0 %v342
      %482 = vmatprep.subr.mxu0 0.0
      %483 = vmatpush1.msra.mxu0 %v345
      %484 = vmatprep.subr.mxu0 0.0
      %485 = vmatpush1.msra.mxu0 %v348
      %486 = vmatprep.subr.mxu0 0.0
      %487 = vmatpush1.msra.mxu0 %v351
      %488 = vmatprep.subr.mxu0 0.0
      %489 = vmatpush1.msra.mxu0 %v354
      %490 = vmatprep.subr.mxu0 0.0
      %491 = vmatpush1.msra.mxu0 %v357
      %492 = vmatprep.subr.mxu0 0.0
      %493 = vmatpush1.msra.mxu0 %v360
      %494 = vmatprep.subr.mxu0 0.0
      %495 = vmatpush1.msra.mxu0 %v363
      %496 = vmatprep.subr.mxu0 0.0
      %497 = vmatpush1.msra.mxu0 %v366
      %498 = vmatprep.subr.mxu0 0.0
      %499 = vmatpush1.msra.mxu0 %v369
      %500 = vmatprep.subr.mxu0 0.0
      %501 = vmatpush1.msra.mxu0 %v372
      %502 = vmatprep.subr.mxu0 0.0
      %503 = vmatpush1.msra.mxu0 %v375
      %504 = vmatprep.subr.mxu0 0.0
      %505 = vmatpush1.msra.mxu0 %v407
      %506 = vmatprep.subr.mxu0 0.0
      %507 = vmatpush1.msra.mxu0 0.0
      %508 = vmatprep.subr.mxu0 0.0
      %509 = vmatpush1.msra.mxu0 0.0
      %510 = vmatprep.subr.mxu0 0.0
      %511 = vmatpush1.msra.mxu0 0.0
      %512 = vmatprep.subr.mxu0 0.0
      %513 = vmatpush1.msra.mxu0 0.0
      %514 = vmatprep.subr.mxu0 0.0
      %515 = vmatpush1.msra.mxu0 0.0
      %516 = vmatprep.subr.mxu0 0.0
      %517 = vmatpush1.msra.mxu0 0.0
      %518 = vmatprep.subr.mxu0 0.0
      %519 = vmatpush1.msra.mxu0 0.0
      %520 = vmatprep.subr.mxu0 0.0
      %521 = vmatpush1.msra.mxu0 0.0
      %522 = vmatprep.subr.mxu0 0.0
      %523 = vmatpush1.msra.mxu0 0.0
      %524 = vmatprep.subr.mxu0 0.0
      %525 = vmatpush1.msra.mxu0 0.0
      %526 = vmatprep.subr.mxu0 0.0
      %527 = vmatpush1.msra.mxu0 0.0
      %528 = vmatprep.subr.mxu0 0.0
      %529 = vmatpush1.msra.mxu0 0.0
      %530 = vmatprep.subr.mxu0 0.0
      %531 = vmatpush1.msra.mxu0 0.0
      %532 = vmatprep.subr.mxu0 0.0
      %533 = vmatpush1.msra.mxu0 0.0
      %534 = vmatprep.subr.mxu0 0.0
      %535 = vmatpush1.msra.mxu0 0.0
      %536 = vmatprep.subr.mxu0 0.0
      %537 = vmatpush1.msra.mxu0 0.0
      %538 = vmatprep.subr.mxu0 0.0
      %539 = vmatpush1.msra.mxu0 0.0
      %540 = vmatprep.subr.mxu0 0.0
      %541 = vmatpush1.msra.mxu0 0.0
      %542 = vmatprep.subr.mxu0 0.0
      %543 = vmatpush1.msra.mxu0 0.0
      %544 = vmatprep.mubr.f32.mxu0 0.0
      %545 = vmatmul.mubr.f32.gmra.mrb[0].mxu0 %v398
      %v546 = vpop.f32.mrb[0].mxu0
      %v547 = vadd.f32 %v392, %v546
      %v548 = vpop.f32.mrb[0].mxu0
      %549 = vdwg.mxu0
      %v550 = vxor.u32 %v476, 2147483648
      %v551 = vmul.f32 %v550, 1.442695
      %v552 = vpow.pop %v551
      %v553 = vadd.f32 %v552, 1.0
      %v554 = vrcp.pop %v553
      %v555 = vmul.f32 1.0, %v554
      %v556 = vxor.u32 %v478, 2147483648
      %v557 = vmul.f32 %v556, 1.442695
      %v558 = vpow.pop %v557
      %v559 = vadd.f32 %v558, 1.0
      %v560 = vrcp.pop %v559
      %v561 = vmul.f32 1.0, %v560
      %v562 = vtanh.pop %v478
      %v563 = vtanh.pop %v547
      %v564 = vxor.u32 %v547, 2147483648
      %v565 = vmul.f32 %v564, 1.442695
      %v566 = vpow.pop %v565
      %v567 = vadd.f32 %v566, 1.0
      %v568 = vrcp.pop %v567
      %v569 = vmul.f32 1.0, %v568
      %v570 = vld [vmem:[#allocation7] sm:$0x3]
      %572 = vrot.lane.b32.xlu0 %v570, 96
      %v573 = vpop.permute.xlu0 %572
      %v575 = vmul.f32 %v555, %v573
      %v576 = vmul.f32 %v561, %v573
      %579 = vrot.lane.b32.xlu0 %v562, 64
      %v580 = vpop.permute.xlu0 %579
      %581 = vrot.lane.b32.xlu0 %v563, 64
      %v582 = vpop.permute.xlu0 %581
      %vm583 = vcmask 523264
      %v584 = vsel %vm583, %v580, %v582
      %v586 = vmul.f32 %v555, %v584
      %588 = vrot.lane.b32.xlu0 %v586, 96
      %v589 = vpop.permute.xlu0 %588
      %v591 = vadd.f32 %v575, %v589
      %v592 = vadd.f32 %v576, %v589
      %v593 = vtanh.pop %v591
      %v594 = vtanh.pop %v592
      %597 = vrot.lane.b32.xlu0 %v593, 64
      %v598 = vpop.permute.xlu0 %597
      %599 = vrot.lane.b32.xlu0 %v594, 64
      %v600 = vpop.permute.xlu0 %599
      %v601 = vsel %vm583, %v598, %v600
      %v603 = vmul.f32 %v569, %v601
      %605 = vrot.lane.b32.xlu0 %v603, 96
      %v606 = vpop.permute.xlu0 %605
      %608 = vst.msk [vmem:[#allocation6] sm:$0x3] %vm90, %v606
      %611 = vrot.lane.b32.xlu0 %v591, 32
      %v612 = vpop.permute.xlu0 %611
      %613 = vrot.lane.b32.xlu0 %v592, 32
      %v614 = vpop.permute.xlu0 %613
      %v615 = vsel %vm259, %v612, %v614
      %617 = vst.msk [vmem:[#allocation7] sm:$0x3] %vm90, %v615
      %v618 = vld [vmem:[%s9] sm:$0xff]
      %v619 = vld [vmem:[%s9 + $0x8] sm:$0xff]
      %v620 = vld [vmem:[%s9 + $0x10] sm:$0xff]
      %v621 = vld [vmem:[%s9 + $0x18] sm:$0xff]
      %v622 = vld [vmem:[%s9 + $0x20] sm:$0xff]
      %v623 = vld [vmem:[%s9 + $0x28] sm:$0xff]
      %v624 = vld [vmem:[%s9 + $0x30] sm:$0xff]
      %v625 = vld [vmem:[%s9 + $0x38] sm:$0xff]
      %v626 = vld [vmem:[%s9 + $0x40] sm:$0xff]
      %v627 = vld [vmem:[%s9 + $0x48] sm:$0xff]
      %v628 = vld [vmem:[%s9 + $0x50] sm:$0xff]
      %v629 = vld [vmem:[%s9 + $0x58] sm:$0xff]
      %v630 = vld [vmem:[%s10] sm:$0x1]
      %v632 = vlaneseq
      %v633 = vshrl.u32 %v632, 7
      %v634 = vsub.s32 0, %v633
      %v635 = vrot.slane %v630, %v634
      %vm637 = vcmask 785408
      %v638 = vsel %vm637, %v606, 0
      %640 = vmatprep.subr.mxu0 0.0
      %641 = vmatpush1.msra.mxu0 %v618
      %642 = vmatprep.subr.mxu0 0.0
      %643 = vmatpush1.msra.mxu0 %v619
      %644 = vmatprep.subr.mxu0 0.0
      %645 = vmatpush1.msra.mxu0 %v620
      %646 = vmatprep.subr.mxu0 0.0
      %647 = vmatpush1.msra.mxu0 %v621
      %648 = vmatprep.subr.mxu0 0.0
      %649 = vmatpush1.msra.mxu0 %v622
      %650 = vmatprep.subr.mxu0 0.0
      %651 = vmatpush1.msra.mxu0 %v623
      %652 = vmatprep.subr.mxu0 0.0
      %653 = vmatpush1.msra.mxu0 %v624
      %654 = vmatprep.subr.mxu0 0.0
      %655 = vmatpush1.msra.mxu0 %v625
      %656 = vmatprep.subr.mxu0 0.0
      %657 = vmatpush1.msra.mxu0 %v626
      %658 = vmatprep.subr.mxu0 0.0
      %659 = vmatpush1.msra.mxu0 %v627
      %660 = vmatprep.subr.mxu0 0.0
      %661 = vmatpush1.msra.mxu0 %v628
      %662 = vmatprep.subr.mxu0 0.0
      %663 = vmatpush1.msra.mxu0 %v629
      %664 = vmatprep.subr.mxu0 0.0
      %665 = vmatpush1.msra.mxu0 0.0
      %666 = vmatprep.subr.mxu0 0.0
      %667 = vmatpush1.msra.mxu0 0.0
      %668 = vmatprep.subr.mxu0 0.0
      %669 = vmatpush1.msra.mxu0 0.0
      %670 = vmatprep.subr.mxu0 0.0
      %671 = vmatpush1.msra.mxu0 0.0
      %672 = vmatprep.subr.mxu0 0.0
      %673 = vmatpush1.msra.mxu0 0.0
      %674 = vmatprep.subr.mxu0 0.0
      %675 = vmatpush1.msra.mxu0 0.0
      %676 = vmatprep.subr.mxu0 0.0
      %677 = vmatpush1.msra.mxu0 0.0
      %678 = vmatprep.subr.mxu0 0.0
      %679 = vmatpush1.msra.mxu0 0.0
      %680 = vmatprep.subr.mxu0 0.0
      %681 = vmatpush1.msra.mxu0 0.0
      %682 = vmatprep.subr.mxu0 0.0
      %683 = vmatpush1.msra.mxu0 0.0
      %684 = vmatprep.subr.mxu0 0.0
      %685 = vmatpush1.msra.mxu0 0.0
      %686 = vmatprep.subr.mxu0 0.0
      %687 = vmatpush1.msra.mxu0 0.0
      %688 = vmatprep.subr.mxu0 0.0
      %689 = vmatpush1.msra.mxu0 0.0
      %690 = vmatprep.subr.mxu0 0.0
      %691 = vmatpush1.msra.mxu0 0.0
      %692 = vmatprep.subr.mxu0 0.0
      %693 = vmatpush1.msra.mxu0 0.0
      %694 = vmatprep.subr.mxu0 0.0
      %695 = vmatpush1.msra.mxu0 0.0
      %696 = vmatprep.subr.mxu0 0.0
      %697 = vmatpush1.msra.mxu0 0.0
      %698 = vmatprep.subr.mxu0 0.0
      %699 = vmatpush1.msra.mxu0 0.0
      %700 = vmatprep.subr.mxu0 0.0
      %701 = vmatpush1.msra.mxu0 0.0
      %702 = vmatprep.subr.mxu0 0.0
      %703 = vmatpush1.msra.mxu0 0.0
      %704 = vmatprep.mubr.f32.mxu0 0.0
      %705 = vmatmul.mubr.f32.gmra.mrb[0].mxu0 %v638
      %v706 = vpop.f32.mrb[0].mxu0
      %v707 = vadd.f32 %v635, %v706
      %v708 = vpop.f32.mrb[0].mxu0
      %709 = vdwg.mxu0
      %v710 = vmul.f32 %v707, 1.442695
      %v711 = vpow.pop %v710
      %v712 = vrsqrt.pop %v711
      %v713 = vmul.f32 %v711, %v712
      %vm714 = vcmp.eq.f32.partialorder %v711, inf
      %v715 = vsel %vm714, %v711, %v713
      %vm716 = vcmp.eq.f32.partialorder %v711, 0.0
      %v717 = vand.u32 %v711, 2147483648
      %v718 = vsel %vm716, %v717, %v715
      %v719 = vadd.f32 %v718, 0.0001
      %v720 = vrcp.pop %v719
      %v722 = vsel %vm117, %v329, 0
      %v725 = vsel %vm135, %v93, 0
      %727 = vmatprep.subr.mxu0 0.0
      %728 = vmatpush1.msra.mxu0 %v725
      %729 = vmatprep.subr.mxu0 0.0
      %730 = vmatpush1.msra.mxu0 0.0
      %731 = vmatprep.subr.mxu0 0.0
      %732 = vmatpush1.msra.mxu0 0.0
      %733 = vmatprep.subr.mxu0 0.0
      %734 = vmatpush1.msra.mxu0 0.0
      %735 = vmatprep.subr.mxu0 0.0
      %736 = vmatpush1.msra.mxu0 0.0
      %737 = vmatprep.subr.mxu0 0.0
      %738 = vmatpush1.msra.mxu0 0.0
      %739 = vmatprep.subr.mxu0 0.0
      %740 = vmatpush1.msra.mxu0 0.0
      %741 = vmatprep.subr.mxu0 0.0
      %742 = vmatpush1.msra.mxu0 0.0
      %743 = vmatprep.subr.mxu0 0.0
      %744 = vmatpush1.msra.mxu0 0.0
      %745 = vmatprep.subr.mxu0 0.0
      %746 = vmatpush1.msra.mxu0 0.0
      %747 = vmatprep.subr.mxu0 0.0
      %748 = vmatpush1.msra.mxu0 0.0
      %749 = vmatprep.subr.mxu0 0.0
      %750 = vmatpush1.msra.mxu0 0.0
      %751 = vmatprep.subr.mxu0 0.0
      %752 = vmatpush1.msra.mxu0 0.0
      %753 = vmatprep.subr.mxu0 0.0
      %754 = vmatpush1.msra.mxu0 0.0
      %755 = vmatprep.subr.mxu0 0.0
      %756 = vmatpush1.msra.mxu0 0.0
      %757 = vmatprep.subr.mxu0 0.0
      %758 = vmatpush1.msra.mxu0 0.0
      %759 = vmatprep.subr.mxu0 0.0
      %760 = vmatpush1.msra.mxu0 0.0
      %761 = vmatprep.subr.mxu0 0.0
      %762 = vmatpush1.msra.mxu0 0.0
      %763 = vmatprep.subr.mxu0 0.0
      %764 = vmatpush1.msra.mxu0 0.0
      %765 = vmatprep.subr.mxu0 0.0
      %766 = vmatpush1.msra.mxu0 0.0
      %767 = vmatprep.subr.mxu0 0.0
      %768 = vmatpush1.msra.mxu0 0.0
      %769 = vmatprep.subr.mxu0 0.0
      %770 = vmatpush1.msra.mxu0 0.0
      %771 = vmatprep.subr.mxu0 0.0
      %772 = vmatpush1.msra.mxu0 0.0
      %773 = vmatprep.subr.mxu0 0.0
      %774 = vmatpush1.msra.mxu0 0.0
      %775 = vmatprep.subr.mxu0 0.0
      %776 = vmatpush1.msra.mxu0 0.0
      %777 = vmatprep.subr.mxu0 0.0
      %778 = vmatpush1.msra.mxu0 0.0
      %779 = vmatprep.subr.mxu0 0.0
      %780 = vmatpush1.msra.mxu0 0.0
      %781 = vmatprep.subr.mxu0 0.0
      %782 = vmatpush1.msra.mxu0 0.0
      %783 = vmatprep.subr.mxu0 0.0
      %784 = vmatpush1.msra.mxu0 0.0
      %785 = vmatprep.subr.mxu0 0.0
      %786 = vmatpush1.msra.mxu0 0.0
      %787 = vmatprep.subr.mxu0 0.0
      %788 = vmatpush1.msra.mxu0 0.0
      %789 = vmatprep.subr.mxu0 0.0
      %790 = vmatpush1.msra.mxu0 0.0
      %791 = vmatprep.mubr.f32.mxu0 0.0
      %792 = vmatmul.mubr.f32.gmra.mrb[0].mxu0 %v722
      %v793 = vpop.f32.mrb[0].mxu0
      %v794 = vadd.f32 0.0, %v793
      %v795 = vpop.f32.mrb[0].mxu0
      %796 = vdwg.mxu0
      %v798 = vlaneseq
      %v799 = vshrl.u32 %v798, 7
      %v800 = vsub.s32 0, %v799
      %v801 = vrot.slane %v96, %v800
      %v803 = vsub.f32 %v801, %v794
      %805 = vrot.lane.b32.xlu0 %v720, 108
      %v806 = vpop.permute.xlu0 %805
      %v808 = vmul.f32 %v803, %v806
      %v810 = vlaneseq
      %v811 = vshrl.u32 %v810, 7
      %v812 = vsub.s32 0, %v811
      %v813 = vrot.slane %v97, %v812
      %v815 = vsub.f32 %v813, %v794
      %v816 = vmul.f32 %v815, %v806
      %v817 = vmul.f32 %v808, 0.70710677
      %v818 = vand.u32 2147483647, %v817
      %v819 = vmul.f32 %v818, 0.3275911
      %v820 = vadd.f32 %v819, 1.0
      %v821 = vrcp.pop %v820
      %v822 = vmul.f32 1.0, %v821
      %v823 = vmul.f32 %v822, 1.0614054
      %v824 = vsub.f32 %v823, 1.4531521
      %v825 = vmul.f32 %v824, %v822
      %v826 = vadd.f32 %v825, 1.4214138
      %v827 = vmul.f32 %v826, %v822
      %v828 = vsub.f32 %v827, 0.28449672
      %v829 = vmul.f32 %v828, %v822
      %v830 = vadd.f32 %v829, 0.2548296
      %v831 = vmul.f32 %v830, %v822
      %v832 = vsub.f32 0.0, %v818
      %v833 = vmul.f32 %v832, %v818
      %v834 = vmul.f32 %v833, 1.442695
      %v835 = vpow.pop %v834
      %v836 = vmul.f32 %v831, %v835
      %v837 = vsub.f32 1.0, %v836
      %vm838 = vcmp.ge.f32.partialorder %v817, 0.0
      %v839 = vsub.f32 0.0, %v837
      %v840 = vsel %vm838, %v837, %v839
      %v841 = vadd.f32 %v840, 1.0
      %v842 = vmul.f32 %v841, 0.5
      %v843 = vmul.f32 %v816, 0.70710677
      %v844 = vand.u32 2147483647, %v843
      %v845 = vmul.f32 %v844, 0.3275911
      %v846 = vadd.f32 %v845, 1.0
      %v847 = vrcp.pop %v846
      %v848 = vmul.f32 1.0, %v847
      %v849 = vmul.f32 %v848, 1.0614054
      %v850 = vsub.f32 %v849, 1.4531521
      %v851 = vmul.f32 %v850, %v848
      %v852 = vadd.f32 %v851, 1.4214138
      %v853 = vmul.f32 %v852, %v848
      %v854 = vsub.f32 %v853, 0.28449672
      %v855 = vmul.f32 %v854, %v848
      %v856 = vadd.f32 %v855, 0.2548296
      %v857 = vmul.f32 %v856, %v848
      %v858 = vsub.f32 0.0, %v844
      %v859 = vmul.f32 %v858, %v844
      %v860 = vmul.f32 %v859, 1.442695
      %v861 = vpow.pop %v860
      %v862 = vmul.f32 %v857, %v861
      %v863 = vsub.f32 1.0, %v862
      %vm864 = vcmp.ge.f32.partialorder %v843, 0.0
      %v865 = vsub.f32 0.0, %v863
      %v866 = vsel %vm864, %v863, %v865
      %v867 = vadd.f32 %v866, 1.0
      %v868 = vmul.f32 %v867, 0.5
      %v869 = vmul.f32 %v808, -0.5
      %v870 = vmul.f32 %v869, %v808
      %v871 = vmul.f32 %v870, 1.442695
      %v872 = vpow.pop %v871
      %v873 = vmul.f32 %v872, 0.3989423
      %v874 = vmul.f32 %v816, -0.5
      %v875 = vmul.f32 %v874, %v816
      %v876 = vmul.f32 %v875, 1.442695
      %v877 = vpow.pop %v876
      %v878 = vmul.f32 %v877, 0.3989423
      %v879 = vsub.f32 %v868, %v842
      %v880 = vadd.f32 %v879, 0.0001
      %v881 = vrcp.pop %v880
      %v882 = vsub.f32 %v878, %v873
      %v883 = vmul.f32 %v882, %v881
      %v884 = vmul.f32 %v808, %v873
      %v885 = vmul.f32 %v816, %v878
      %v886 = vsub.f32 %v884, %v885
      %888 = vrot.lane.b32.xlu0 %v883, 20
      %v889 = vpop.permute.xlu0 %888
      %v891 = vmul.f32 %v719, %v889
      %893 = vrot.lane.b32.xlu0 %v891, 108
      %v894 = vpop.permute.xlu0 %893
      %v896 = vsub.f32 %v794, %v894
      %v897 = vmul.f32 %v880, %v896
      %v898 = vmul.f32 %v842, %v801
      %v899 = vadd.f32 %v897, %v898
      %v900 = vsub.f32 1.0, %v868
      %v901 = vmul.f32 %v900, %v813
      %v902 = vadd.f32 %v899, %v901
      %v903 = vmul.f32 %v886, %v881
      %v904 = vadd.f32 %v903, 1.0
      %v905 = vmul.f32 %v883, %v883
      %v906 = vsub.f32 %v904, %v905
      %908 = vrot.lane.b32.xlu0 %v906, 20
      %v909 = vpop.permute.xlu0 %908
      %v911 = vmul.f32 %v711, %v909
      %v912 = vsub.f32 %v110, %v902
      %914 = vrot.lane.b32.xlu0 %v711, 112
      %v915 = vpop.permute.xlu0 %914
      %v917 = vrot.slane %v711, 1
      %918 = vrot.lane.b32.xlu0 %v917, 116
      %v919 = vpop.permute.xlu0 %918
      %v921 = vsel %vm117, %v915, %v919
      %v923 = vrot.slane %v880, 1
      %924 = vrot.lane.b32.xlu0 %v923, 3
      %v925 = vpop.permute.xlu0 %924
      %vm927 = vcmask 23552
      %v928 = vsel %vm927, %v880, %v925
      %930 = vrot.lane.b32.xlu0 %v911, 108
      %v931 = vpop.permute.xlu0 %930
      %v933 = vrot.slane %v911, 1
      %934 = vrot.lane.b32.xlu0 %v933, 111
      %v935 = vpop.permute.xlu0 %934
      %v937 = vsel %vm927, %v931, %v935
      %v939 = vrot.slane %v912, 1
      %940 = vrot.lane.b32.xlu0 %v939, 3
      %v941 = vpop.permute.xlu0 %940
      %v943 = vsel %vm927, %v912, %v941
      %v945 = vrot.slane %v707, 7
      %946 = vrot.lane.b32.xlu0 %v945, 124
      %v947 = vpop.permute.xlu0 %946
      %v949 = vrot.slane %v707, 6
      %950 = vrot.lane.b32.xlu0 %v949, 120
      %v951 = vpop.permute.xlu0 %950
      %v953 = vrot.slane %v707, 5
      %954 = vrot.lane.b32.xlu0 %v953, 116
      %v955 = vpop.permute.xlu0 %954
      %v958 = vrot.slane %v707, 4
      %959 = vrot.lane.b32.xlu0 %v958, 124
      %v960 = vpop.permute.xlu0 %959
      %v962 = vrot.slane %v707, 3
      %963 = vrot.lane.b32.xlu0 %v962, 120
      %v964 = vpop.permute.xlu0 %963
      %v966 = vrot.slane %v707, 2
      %967 = vrot.lane.b32.xlu0 %v966, 116
      %v968 = vpop.permute.xlu0 %967
      %vm970 = vcmask 1040384
      %v971 = vsel %vm970, %v707, %v947
      %vm972 = vcmask 1041408
      %v973 = vsel %vm972, %v971, %v951
      %vm974 = vcmask 1042432
      %v975 = vsel %vm974, %v973, %v955
      %v976 = vsel %vm135, %v975, %v953
      %vm977 = vcmask 1044480
      %v978 = vsel %vm977, %v976, %v960
      %vm979 = vcmask 1045504
      %v980 = vsel %vm979, %v978, %v964
      %vm981 = vcmask 1046528
      %v982 = vsel %vm981, %v980, %v968
      %984 = vrot.lane.b32.xlu0 %v982, 4
      %v985 = vpop.permute.xlu0 %984
      %v987 = vsel %vm117, %v982, %v985
      %v988 = vmul.f32 %v987, %v100
      %v989 = vld [vmem:[#allocation3] sm:$0xff]
      %v991 = vsel %vm85, %v988, 0
      %993 = vmatprep.subr.mxu0 0.0
      %994 = vmatpush1.msra.mxu0 %v989
      %995 = vmatprep.subr.mxu0 0.0
      %996 = vmatpush1.msra.mxu0 0.0
      %997 = vmatprep.subr.mxu0 0.0
      %998 = vmatpush1.msra.mxu0 0.0
      %999 = vmatprep.subr.mxu0 0.0
      %1000 = vmatpush1.msra.mxu0 0.0
      %1001 = vmatprep.subr.mxu0 0.0
      %1002 = vmatpush1.msra.mxu0 0.0
      %1003 = vmatprep.subr.mxu0 0.0
      %1004 = vmatpush1.msra.mxu0 0.0
      %1005 = vmatprep.subr.mxu0 0.0
      %1006 = vmatpush1.msra.mxu0 0.0
      %1007 = vmatprep.subr.mxu0 0.0
      %1008 = vmatpush1.msra.mxu0 0.0
      %1009 = vmatprep.subr.mxu0 0.0
      %1010 = vmatpush1.msra.mxu0 0.0
      %1011 = vmatprep.subr.mxu0 0.0
      %1012 = vmatpush1.msra.mxu0 0.0
      %1013 = vmatprep.subr.mxu0 0.0
      %1014 = vmatpush1.msra.mxu0 0.0
      %1015 = vmatprep.subr.mxu0 0.0
      %1016 = vmatpush1.msra.mxu0 0.0
      %1017 = vmatprep.subr.mxu0 0.0
      %1018 = vmatpush1.msra.mxu0 0.0
      %1019 = vmatprep.subr.mxu0 0.0
      %1020 = vmatpush1.msra.mxu0 0.0
      %1021 = vmatprep.subr.mxu0 0.0
      %1022 = vmatpush1.msra.mxu0 0.0
      %1023 = vmatprep.subr.mxu0 0.0
      %1024 = vmatpush1.msra.mxu0 0.0
      %1025 = vmatprep.subr.mxu0 0.0
      %1026 = vmatpush1.msra.mxu0 0.0
      %1027 = vmatprep.subr.mxu0 0.0
      %1028 = vmatpush1.msra.mxu0 0.0
      %1029 = vmatprep.subr.mxu0 0.0
      %1030 = vmatpush1.msra.mxu0 0.0
      %1031 = vmatprep.subr.mxu0 0.0
      %1032 = vmatpush1.msra.mxu0 0.0
      %1033 = vmatprep.subr.mxu0 0.0
      %1034 = vmatpush1.msra.mxu0 0.0
      %1035 = vmatprep.subr.mxu0 0.0
      %1036 = vmatpush1.msra.mxu0 0.0
      %1037 = vmatprep.subr.mxu0 0.0
      %1038 = vmatpush1.msra.mxu0 0.0
      %1039 = vmatprep.subr.mxu0 0.0
      %1040 = vmatpush1.msra.mxu0 0.0
      %1041 = vmatprep.subr.mxu0 0.0
      %1042 = vmatpush1.msra.mxu0 0.0
      %1043 = vmatprep.subr.mxu0 0.0
      %1044 = vmatpush1.msra.mxu0 0.0
      %1045 = vmatprep.subr.mxu0 0.0
      %1046 = vmatpush1.msra.mxu0 0.0
      %1047 = vmatprep.subr.mxu0 0.0
      %1048 = vmatpush1.msra.mxu0 0.0
      %1049 = vmatprep.subr.mxu0 0.0
      %1050 = vmatpush1.msra.mxu0 0.0
      %1051 = vmatprep.subr.mxu0 0.0
      %1052 = vmatpush1.msra.mxu0 0.0
      %1053 = vmatprep.subr.mxu0 0.0
      %1054 = vmatpush1.msra.mxu0 0.0
      %1055 = vmatprep.subr.mxu0 0.0
      %1056 = vmatpush1.msra.mxu0 0.0
      %1057 = vmatprep.mubr.f32.mxu0 0.0
      %1058 = vmatmul.mubr.f32.gmra.mrb[0].mxu0 %v991
      %v1059 = vpop.f32.mrb[0].mxu0
      %v1060 = vadd.f32 0.0, %v1059
      %v1061 = vpop.f32.mrb[0].mxu0
      %1062 = vdwg.mxu0
      %v1063 = vlaneseq
      %v1064 = vshrl.u32 %v1063, 7
      %v1065 = vsub.s32 0, %v1064
      %v1066 = vrot.slane %v921, %v1065
      %v1067 = vmul.f32 %v98, %v1066
      %v1069 = vsel %vm85, %v1060, 0
      %1071 = vmatprep.subr.mxu0 0.0
      %1072 = vmatpush1.xpose.msra.mxu0 %v991
      %1073 = vmatprep.subr.mxu0 0.0
      %1074 = vmatpush1.xpose.msra.mxu0 0.0
      %1075 = vmatprep.subr.mxu0 0.0
      %1076 = vmatpush1.xpose.msra.mxu0 0.0
      %1077 = vmatprep.subr.mxu0 0.0
      %1078 = vmatpush1.xpose.msra.mxu0 0.0
      %1079 = vmatprep.subr.mxu0 0.0
      %1080 = vmatpush1.xpose.msra.mxu0 0.0
      %1081 = vmatprep.subr.mxu0 0.0
      %1082 = vmatpush1.xpose.msra.mxu0 0.0
      %1083 = vmatprep.subr.mxu0 0.0
      %1084 = vmatpush1.xpose.msra.mxu0 0.0
      %1085 = vmatprep.subr.mxu0 0.0
      %1086 = vmatpush1.xpose.msra.mxu0 0.0
      %1087 = vmatprep.subr.mxu0 0.0
      %1088 = vmatpush1.xpose.msra.mxu0 0.0
      %1089 = vmatprep.subr.mxu0 0.0
      %1090 = vmatpush1.xpose.msra.mxu0 0.0
      %1091 = vmatprep.subr.mxu0 0.0
      %1092 = vmatpush1.xpose.msra.mxu0 0.0
      %1093 = vmatprep.subr.mxu0 0.0
      %1094 = vmatpush1.xpose.msra.mxu0 0.0
      %1095 = vmatprep.subr.mxu0 0.0
      %1096 = vmatpush1.xpose.msra.mxu0 0.0
      %1097 = vmatprep.subr.mxu0 0.0
      %1098 = vmatpush1.xpose.msra.mxu0 0.0
      %1099 = vmatprep.subr.mxu0 0.0
      %1100 = vmatpush1.xpose.msra.mxu0 0.0
      %1101 = vmatprep.subr.mxu0 0.0
      %1102 = vmatpush1.xpose.msra.mxu0 0.0
      %1103 = vmatprep.subr.mxu0 0.0
      %1104 = vmatpush1.xpose.msra.mxu0 0.0
      %1105 = vmatprep.subr.mxu0 0.0
      %1106 = vmatpush1.xpose.msra.mxu0 0.0
      %1107 = vmatprep.subr.mxu0 0.0
      %1108 = vmatpush1.xpose.msra.mxu0 0.0
      %1109 = vmatprep.subr.mxu0 0.0
      %1110 = vmatpush1.xpose.msra.mxu0 0.0
      %1111 = vmatprep.subr.mxu0 0.0
      %1112 = vmatpush1.xpose.msra.mxu0 0.0
      %1113 = vmatprep.subr.mxu0 0.0
      %1114 = vmatpush1.xpose.msra.mxu0 0.0
      %1115 = vmatprep.subr.mxu0 0.0
      %1116 = vmatpush1.xpose.msra.mxu0 0.0
      %1117 = vmatprep.subr.mxu0 0.0
      %1118 = vmatpush1.xpose.msra.mxu0 0.0
      %1119 = vmatprep.subr.mxu0 0.0
      %1120 = vmatpush1.xpose.msra.mxu0 0.0
      %1121 = vmatprep.subr.mxu0 0.0
      %1122 = vmatpush1.xpose.msra.mxu0 0.0
      %1123 = vmatprep.subr.mxu0 0.0
      %1124 = vmatpush1.xpose.msra.mxu0 0.0
      %1125 = vmatprep.subr.mxu0 0.0
      %1126 = vmatpush1.xpose.msra.mxu0 0.0
      %1127 = vmatprep.subr.mxu0 0.0
      %1128 = vmatpush1.xpose.msra.mxu0 0.0
      %1129 = vmatprep.subr.mxu0 0.0
      %1130 = vmatpush1.xpose.msra.mxu0 0.0
      %1131 = vmatprep.subr.mxu0 0.0
      %1132 = vmatpush1.xpose.msra.mxu0 0.0
      %1133 = vmatprep.subr.mxu0 0.0
      %1134 = vmatpush1.xpose.msra.mxu0 0.0
      %1135 = vmatprep.mubr.f32.mxu0 0.0
      %1136 = vmatmul.mubr.f32.gmra.mrb[0].mxu0 %v1069
      %v1137 = vpop.f32.mrb[0].mxu0
      %v1138 = vadd.f32 %v1067, %v1137
      %v1139 = vpop.f32.mrb[0].mxu0
      %1140 = vdwg.mxu0
      %v1142 = vsel %vm85, %v1138, 0
      %1144 = vmatprep.subr.mxu0 0.0
      %1145 = vmatpush1.msra.mxu0 %v95
      %1146 = vmatprep.subr.mxu0 0.0
      %1147 = vmatpush1.msra.mxu0 0.0
      %1148 = vmatprep.subr.mxu0 0.0
      %1149 = vmatpush1.msra.mxu0 0.0
      %1150 = vmatprep.subr.mxu0 0.0
      %1151 = vmatpush1.msra.mxu0 0.0
      %1152 = vmatprep.subr.mxu0 0.0
      %1153 = vmatpush1.msra.mxu0 0.0
      %1154 = vmatprep.subr.mxu0 0.0
      %1155 = vmatpush1.msra.mxu0 0.0
      %1156 = vmatprep.subr.mxu0 0.0
      %1157 = vmatpush1.msra.mxu0 0.0
      %1158 = vmatprep.subr.mxu0 0.0
      %1159 = vmatpush1.msra.mxu0 0.0
      %1160 = vmatprep.subr.mxu0 0.0
      %1161 = vmatpush1.msra.mxu0 0.0
      %1162 = vmatprep.subr.mxu0 0.0
      %1163 = vmatpush1.msra.mxu0 0.0
      %1164 = vmatprep.subr.mxu0 0.0
      %1165 = vmatpush1.msra.mxu0 0.0
      %1166 = vmatprep.subr.mxu0 0.0
      %1167 = vmatpush1.msra.mxu0 0.0
      %1168 = vmatprep.subr.mxu0 0.0
      %1169 = vmatpush1.msra.mxu0 0.0
      %1170 = vmatprep.subr.mxu0 0.0
      %1171 = vmatpush1.msra.mxu0 0.0
      %1172 = vmatprep.subr.mxu0 0.0
      %1173 = vmatpush1.msra.mxu0 0.0
      %1174 = vmatprep.subr.mxu0 0.0
      %1175 = vmatpush1.msra.mxu0 0.0
      %1176 = vmatprep.subr.mxu0 0.0
      %1177 = vmatpush1.msra.mxu0 0.0
      %1178 = vmatprep.subr.mxu0 0.0
      %1179 = vmatpush1.msra.mxu0 0.0
      %1180 = vmatprep.subr.mxu0 0.0
      %1181 = vmatpush1.msra.mxu0 0.0
      %1182 = vmatprep.subr.mxu0 0.0
      %1183 = vmatpush1.msra.mxu0 0.0
      %1184 = vmatprep.subr.mxu0 0.0
      %1185 = vmatpush1.msra.mxu0 0.0
      %1186 = vmatprep.subr.mxu0 0.0
      %1187 = vmatpush1.msra.mxu0 0.0
      %1188 = vmatprep.subr.mxu0 0.0
      %1189 = vmatpush1.msra.mxu0 0.0
      %1190 = vmatprep.subr.mxu0 0.0
      %1191 = vmatpush1.msra.mxu0 0.0
      %1192 = vmatprep.subr.mxu0 0.0
      %1193 = vmatpush1.msra.mxu0 0.0
      %1194 = vmatprep.subr.mxu0 0.0
      %1195 = vmatpush1.msra.mxu0 0.0
      %1196 = vmatprep.subr.mxu0 0.0
      %1197 = vmatpush1.msra.mxu0 0.0
      %1198 = vmatprep.subr.mxu0 0.0
      %1199 = vmatpush1.msra.mxu0 0.0
      %1200 = vmatprep.subr.mxu0 0.0
      %1201 = vmatpush1.msra.mxu0 0.0
      %1202 = vmatprep.subr.mxu0 0.0
      %1203 = vmatpush1.msra.mxu0 0.0
      %1204 = vmatprep.subr.mxu0 0.0
      %1205 = vmatpush1.msra.mxu0 0.0
      %1206 = vmatprep.subr.mxu0 0.0
      %1207 = vmatpush1.msra.mxu0 0.0
      %1208 = vmatprep.mubr.f32.mxu0 0.0
      %1209 = vmatmul.mubr.f32.gmra.mrb[0].mxu0 %v1142
      %v1210 = vpop.f32.mrb[0].mxu0
      %v1211 = vadd.f32 0.0, %v1210
      %v1212 = vpop.f32.mrb[0].mxu0
      %1213 = vdwg.mxu0
      %v1214 = vlaneseq
      %v1215 = vshrl.u32 %v1214, 7
      %v1216 = vsub.s32 0, %v1215
      %v1217 = vrot.slane %v928, %v1216
      %v1218 = vmul.f32 %v1211, %v1217
      %v1220 = vsel %vm85, %v94, 0
      %1222 = vmatprep.subr.mxu0 0.0
      %1223 = vmatpush1.msra.mxu0 %v1218
      %1224 = vmatprep.subr.mxu0 0.0
      %1225 = vmatpush1.msra.mxu0 0.0
      %1226 = vmatprep.subr.mxu0 0.0
      %1227 = vmatpush1.msra.mxu0 0.0
      %1228 = vmatprep.subr.mxu0 0.0
      %1229 = vmatpush1.msra.mxu0 0.0
      %1230 = vmatprep.subr.mxu0 0.0
      %1231 = vmatpush1.msra.mxu0 0.0
      %1232 = vmatprep.subr.mxu0 0.0
      %1233 = vmatpush1.msra.mxu0 0.0
      %1234 = vmatprep.subr.mxu0 0.0
      %1235 = vmatpush1.msra.mxu0 0.0
      %1236 = vmatprep.subr.mxu0 0.0
      %1237 = vmatpush1.msra.mxu0 0.0
      %1238 = vmatprep.subr.mxu0 0.0
      %1239 = vmatpush1.msra.mxu0 0.0
      %1240 = vmatprep.subr.mxu0 0.0
      %1241 = vmatpush1.msra.mxu0 0.0
      %1242 = vmatprep.subr.mxu0 0.0
      %1243 = vmatpush1.msra.mxu0 0.0
      %1244 = vmatprep.subr.mxu0 0.0
      %1245 = vmatpush1.msra.mxu0 0.0
      %1246 = vmatprep.subr.mxu0 0.0
      %1247 = vmatpush1.msra.mxu0 0.0
      %1248 = vmatprep.subr.mxu0 0.0
      %1249 = vmatpush1.msra.mxu0 0.0
      %1250 = vmatprep.subr.mxu0 0.0
      %1251 = vmatpush1.msra.mxu0 0.0
      %1252 = vmatprep.subr.mxu0 0.0
      %1253 = vmatpush1.msra.mxu0 0.0
      %1254 = vmatprep.subr.mxu0 0.0
      %1255 = vmatpush1.msra.mxu0 0.0
      %1256 = vmatprep.subr.mxu0 0.0
      %1257 = vmatpush1.msra.mxu0 0.0
      %1258 = vmatprep.subr.mxu0 0.0
      %1259 = vmatpush1.msra.mxu0 0.0
      %1260 = vmatprep.subr.mxu0 0.0
      %1261 = vmatpush1.msra.mxu0 0.0
      %1262 = vmatprep.subr.mxu0 0.0
      %1263 = vmatpush1.msra.mxu0 0.0
      %1264 = vmatprep.subr.mxu0 0.0
      %1265 = vmatpush1.msra.mxu0 0.0
      %1266 = vmatprep.subr.mxu0 0.0
      %1267 = vmatpush1.msra.mxu0 0.0
      %1268 = vmatprep.subr.mxu0 0.0
      %1269 = vmatpush1.msra.mxu0 0.0
      %1270 = vmatprep.subr.mxu0 0.0
      %1271 = vmatpush1.msra.mxu0 0.0
      %1272 = vmatprep.subr.mxu0 0.0
      %1273 = vmatpush1.msra.mxu0 0.0
      %1274 = vmatprep.subr.mxu0 0.0
      %1275 = vmatpush1.msra.mxu0 0.0
      %1276 = vmatprep.subr.mxu0 0.0
      %1277 = vmatpush1.msra.mxu0 0.0
      %1278 = vmatprep.subr.mxu0 0.0
      %1279 = vmatpush1.msra.mxu0 0.0
      %1280 = vmatprep.subr.mxu0 0.0
      %1281 = vmatpush1.msra.mxu0 0.0
      %1282 = vmatprep.subr.mxu0 0.0
      %1283 = vmatpush1.msra.mxu0 0.0
      %1284 = vmatprep.subr.mxu0 0.0
      %1285 = vmatpush1.msra.mxu0 0.0
      %1286 = vmatprep.mubr.f32.mxu0 0.0
      %1287 = vmatmul.mubr.f32.gmra.mrb[0].mxu0 %v1220
      %v1288 = vpop.f32.mrb[0].mxu0
      %v1289 = vadd.f32 0.0, %v1288
      %v1290 = vpop.f32.mrb[0].mxu0
      %1291 = vdwg.mxu0
      %v1292 = vmul.f32 %v99, %v1217
      %vm1293 = vcmask 46080
      %v1294 = vsel %vm1293, %v1292, 0.0
      %1295 = vadd.xlane.f32.xlu0 %v1294
      %v1296 = vpop.xlane.xlu0 %1295
      %v1297 = vmul.f32 %v1296, %v1289
      %v1298 = vlaneseq
      %v1299 = vshrl.u32 %v1298, 7
      %v1300 = vsub.s32 0, %v1299
      %v1301 = vrot.slane %v937, %v1300
      %v1302 = vmul.f32 %v99, %v1301
      %v1303 = vadd.f32 %v1297, %v1302
      %1305 = vrot.lane.b32.xlu0 %v1303, 125
      %v1306 = vpop.permute.xlu0 %1305
      %v1308 = vadd.f32 %v1303, %v1306
      %v1310 = vrot.slane %v1308, 1
      %1311 = vrot.lane.b32.xlu0 %v1310, 127
      %v1312 = vpop.permute.xlu0 %1311
      %v1314 = vmul.f32 %v1308, %v1312
      %1315 = vrot.lane.b32.xlu0 %v1310, 1
      %v1316 = vpop.permute.xlu0 %1315
      %v1318 = vmul.f32 %v1308, %v1316
      %1320 = vrot.lane.b32.xlu0 %v1318, 127
      %v1321 = vpop.permute.xlu0 %1320
      %v1323 = vsub.f32 %v1314, %v1321
      %v1324 = vrot.slane %v1308, 2
      %1325 = vrot.lane.b32.xlu0 %v1324, 1
      %v1326 = vpop.permute.xlu0 %1325
      %v1328 = vmul.f32 %v1308, %v1326
      %1329 = vrot.lane.b32.xlu0 %v1324, 127
      %v1330 = vpop.permute.xlu0 %1329
      %v1332 = vmul.f32 %v1308, %v1330
      %1334 = vrot.lane.b32.xlu0 %v1332, 1
      %v1335 = vpop.permute.xlu0 %1334
      %v1337 = vsub.f32 %v1328, %v1335
      %1338 = vrot.lane.b32.xlu0 %v1310, 2
      %v1339 = vpop.permute.xlu0 %1338
      %v1341 = vmul.f32 %v1308, %v1339
      %1342 = vrot.lane.b32.xlu0 %v1310, 126
      %v1343 = vpop.permute.xlu0 %1342
      %v1345 = vmul.f32 %v1308, %v1343
      %1347 = vrot.lane.b32.xlu0 %v1345, 2
      %v1348 = vpop.permute.xlu0 %1347
      %v1350 = vsub.f32 %v1341, %v1348
      %1351 = vrot.lane.b32.xlu0 %v1324, 126
      %v1352 = vpop.permute.xlu0 %1351
      %v1354 = vmul.f32 %v1308, %v1352
      %1355 = vrot.lane.b32.xlu0 %v1324, 2
      %v1356 = vpop.permute.xlu0 %1355
      %v1358 = vmul.f32 %v1308, %v1356
      %1360 = vrot.lane.b32.xlu0 %v1358, 126
      %v1361 = vpop.permute.xlu0 %1360
      %v1363 = vsub.f32 %v1354, %v1361
      %v1365 = vrot.slane %v1323, 1
      %1366 = vrot.lane.b32.xlu0 %v1365, 127
      %v1367 = vpop.permute.xlu0 %1366
      %v1369 = vmul.f32 %v1308, %v1367
      %v1371 = vrot.slane %v1350, 1
      %1372 = vrot.lane.b32.xlu0 %v1371, 127
      %v1373 = vpop.permute.xlu0 %1372
      %v1375 = vmul.f32 %v1308, %v1373
      %1377 = vrot.lane.b32.xlu0 %v1375, 127
      %v1378 = vpop.permute.xlu0 %1377
      %v1380 = vadd.f32 %v1369, %v1378
      %1381 = vrot.lane.b32.xlu0 %v1365, 2
      %v1382 = vpop.permute.xlu0 %1381
      %v1384 = vmul.f32 %v1308, %v1382
      %1386 = vrot.lane.b32.xlu0 %v1384, 126
      %v1387 = vpop.permute.xlu0 %1386
      %v1389 = vadd.f32 %v1380, %v1387
      %v1390 = vrcp.pop %v1389
      %v1391 = vmul.f32 1.0, %v1390
      %1392 = vrot.lane.b32.xlu0 %v1323, 127
      %v1393 = vpop.permute.xlu0 %1392
      %v1396 = vrot.slane %v1337, 7
      %1397 = vrot.lane.b32.xlu0 %v1396, 127
      %v1398 = vpop.permute.xlu0 %1397
      %v1400 = vrot.slane %v1323, 7
      %1401 = vrot.lane.b32.xlu0 %v1400, 1
      %v1402 = vpop.permute.xlu0 %1401
      %vm1404 = vcmask 7168
      %v1405 = vsel %vm1404, %v1393, %v1398
      %vm1406 = vcmask 15360
      %v1407 = vsel %vm1406, %v1405, %v1402
      %1408 = vrot.lane.b32.xlu0 %v1350, 126
      %v1409 = vpop.permute.xlu0 %1408
      %v1412 = vrot.slane %v1363, 7
      %1413 = vrot.lane.b32.xlu0 %v1412, 1
      %v1414 = vpop.permute.xlu0 %1413
      %v1416 = vrot.slane %v1350, 7
      %v1418 = vsel %vm1404, %v1409, %v1414
      %v1419 = vsel %vm1406, %v1418, %v1416
      %1421 = vrot.lane.b32.xlu0 %v1400, 2
      %v1422 = vpop.permute.xlu0 %1421
      %v1424 = vsel %vm1404, %v1323, %v1396
      %v1425 = vsel %vm1406, %v1424, %v1422
      %v1427 = vrot.slane %v1407, 1
      %v1430 = vrot.slane %v1425, 7
      %v1432 = vsel %vm970, %v1427, %v1419
      %v1433 = vsel %vm972, %v1432, %v1430
      %s1435 = vtos %v1391
      %v1436 = vstv %s1435
      %v1438 = vmul.f32 %v1433, %v1436
      %v1439 = vrot.slane %v1407, 4
      %v1442 = vrot.slane %v1419, 3
      %v1444 = vrot.slane %v1425, 2
      %v1446 = vsel %vm970, %v1439, %v1442
      %v1447 = vsel %vm972, %v1446, %v1444
      %v1448 = vrot.slane %v1391, 3
      %s1449 = vtos %v1448
      %v1450 = vstv %s1449
      %v1452 = vmul.f32 %v1447, %v1450
      %v1454 = vrot.slane %v1452, 5
      %v1456 = vsel %vm974, %v1438, %v1454
      %1458 = vrot.lane.b32.xlu0 %v1456, 3
      %v1459 = vpop.permute.xlu0 %1458
      %v1461 = vsel %vm927, %v1456, %v1459
      %v1462 = vmul.f32 %v1461, %v101
      %vm1463 = vcmask 48128
      %v1465 = vsel %vm1463, %v1218, 0
      %v1468 = vsel %vm979, %v1462, 0
      %1470 = vmatprep.subr.mxu0 0.0
      %1471 = vmatpush1.msra.mxu0 %v1468
      %1472 = vmatprep.subr.mxu0 0.0
      %1473 = vmatpush1.msra.mxu0 0.0
      %1474 = vmatprep.subr.mxu0 0.0
      %1475 = vmatpush1.msra.mxu0 0.0
      %1476 = vmatprep.subr.mxu0 0.0
      %1477 = vmatpush1.msra.mxu0 0.0
      %1478 = vmatprep.subr.mxu0 0.0
      %1479 = vmatpush1.msra.mxu0 0.0
      %1480 = vmatprep.subr.mxu0 0.0
      %1481 = vmatpush1.msra.mxu0 0.0
      %1482 = vmatprep.subr.mxu0 0.0
      %1483 = vmatpush1.msra.mxu0 0.0
      %1484 = vmatprep.subr.mxu0 0.0
      %1485 = vmatpush1.msra.mxu0 0.0
      %1486 = vmatprep.subr.mxu0 0.0
      %1487 = vmatpush1.msra.mxu0 0.0
      %1488 = vmatprep.subr.mxu0 0.0
      %1489 = vmatpush1.msra.mxu0 0.0
      %1490 = vmatprep.subr.mxu0 0.0
      %1491 = vmatpush1.msra.mxu0 0.0
      %1492 = vmatprep.subr.mxu0 0.0
      %1493 = vmatpush1.msra.mxu0 0.0
      %1494 = vmatprep.subr.mxu0 0.0
      %1495 = vmatpush1.msra.mxu0 0.0
      %1496 = vmatprep.subr.mxu0 0.0
      %1497 = vmatpush1.msra.mxu0 0.0
      %1498 = vmatprep.subr.mxu0 0.0
      %1499 = vmatpush1.msra.mxu0 0.0
      %1500 = vmatprep.subr.mxu0 0.0
      %1501 = vmatpush1.msra.mxu0 0.0
      %1502 = vmatprep.subr.mxu0 0.0
      %1503 = vmatpush1.msra.mxu0 0.0
      %1504 = vmatprep.subr.mxu0 0.0
      %1505 = vmatpush1.msra.mxu0 0.0
      %1506 = vmatprep.subr.mxu0 0.0
      %1507 = vmatpush1.msra.mxu0 0.0
      %1508 = vmatprep.subr.mxu0 0.0
      %1509 = vmatpush1.msra.mxu0 0.0
      %1510 = vmatprep.subr.mxu0 0.0
      %1511 = vmatpush1.msra.mxu0 0.0
      %1512 = vmatprep.subr.mxu0 0.0
      %1513 = vmatpush1.msra.mxu0 0.0
      %1514 = vmatprep.subr.mxu0 0.0
      %1515 = vmatpush1.msra.mxu0 0.0
      %1516 = vmatprep.subr.mxu0 0.0
      %1517 = vmatpush1.msra.mxu0 0.0
      %1518 = vmatprep.subr.mxu0 0.0
      %1519 = vmatpush1.msra.mxu0 0.0
      %1520 = vmatprep.subr.mxu0 0.0
      %1521 = vmatpush1.msra.mxu0 0.0
      %1522 = vmatprep.subr.mxu0 0.0
      %1523 = vmatpush1.msra.mxu0 0.0
      %1524 = vmatprep.subr.mxu0 0.0
      %1525 = vmatpush1.msra.mxu0 0.0
      %1526 = vmatprep.subr.mxu0 0.0
      %1527 = vmatpush1.msra.mxu0 0.0
      %1528 = vmatprep.subr.mxu0 0.0
      %1529 = vmatpush1.msra.mxu0 0.0
      %1530 = vmatprep.subr.mxu0 0.0
      %1531 = vmatpush1.msra.mxu0 0.0
      %1532 = vmatprep.subr.mxu0 0.0
      %1533 = vmatpush1.msra.mxu0 0.0
      %1534 = vmatprep.mubr.f32.mxu0 0.0
      %1535 = vmatmul.mubr.f32.gmra.mrb[0].mxu0 %v1465
      %v1536 = vpop.f32.mrb[0].mxu0
      %v1537 = vadd.f32 0.0, %v1536
      %v1538 = vpop.f32.mrb[0].mxu0
      %1539 = vdwg.mxu0
      %v1541 = vsel %vm1463, %v943, 0
      %v1544 = vsel %vm1463, %v1537, 0
      %1546 = vmatprep.subr.mxu0 0.0
      %1547 = vmatpush1.xpose.msra.mxu0 %v1544
      %1548 = vmatprep.subr.mxu0 0.0
      %1549 = vmatpush1.xpose.msra.mxu0 0.0
      %1550 = vmatprep.subr.mxu0 0.0
      %1551 = vmatpush1.xpose.msra.mxu0 0.0
      %1552 = vmatprep.subr.mxu0 0.0
      %1553 = vmatpush1.xpose.msra.mxu0 0.0
      %1554 = vmatprep.subr.mxu0 0.0
      %1555 = vmatpush1.xpose.msra.mxu0 0.0
      %1556 = vmatprep.subr.mxu0 0.0
      %1557 = vmatpush1.xpose.msra.mxu0 0.0
      %1558 = vmatprep.subr.mxu0 0.0
      %1559 = vmatpush1.xpose.msra.mxu0 0.0
      %1560 = vmatprep.subr.mxu0 0.0
      %1561 = vmatpush1.xpose.msra.mxu0 0.0
      %1562 = vmatprep.subr.mxu0 0.0
      %1563 = vmatpush1.xpose.msra.mxu0 0.0
      %1564 = vmatprep.subr.mxu0 0.0
      %1565 = vmatpush1.xpose.msra.mxu0 0.0
      %1566 = vmatprep.subr.mxu0 0.0
      %1567 = vmatpush1.xpose.msra.mxu0 0.0
      %1568 = vmatprep.subr.mxu0 0.0
      %1569 = vmatpush1.xpose.msra.mxu0 0.0
      %1570 = vmatprep.subr.mxu0 0.0
      %1571 = vmatpush1.xpose.msra.mxu0 0.0
      %1572 = vmatprep.subr.mxu0 0.0
      %1573 = vmatpush1.xpose.msra.mxu0 0.0
      %1574 = vmatprep.subr.mxu0 0.0
      %1575 = vmatpush1.xpose.msra.mxu0 0.0
      %1576 = vmatprep.subr.mxu0 0.0
      %1577 = vmatpush1.xpose.msra.mxu0 0.0
      %1578 = vmatprep.subr.mxu0 0.0
      %1579 = vmatpush1.xpose.msra.mxu0 0.0
      %1580 = vmatprep.subr.mxu0 0.0
      %1581 = vmatpush1.xpose.msra.mxu0 0.0
      %1582 = vmatprep.subr.mxu0 0.0
      %1583 = vmatpush1.xpose.msra.mxu0 0.0
      %1584 = vmatprep.subr.mxu0 0.0
      %1585 = vmatpush1.xpose.msra.mxu0 0.0
      %1586 = vmatprep.subr.mxu0 0.0
      %1587 = vmatpush1.xpose.msra.mxu0 0.0
      %1588 = vmatprep.subr.mxu0 0.0
      %1589 = vmatpush1.xpose.msra.mxu0 0.0
      %1590 = vmatprep.subr.mxu0 0.0
      %1591 = vmatpush1.xpose.msra.mxu0 0.0
      %1592 = vmatprep.subr.mxu0 0.0
      %1593 = vmatpush1.xpose.msra.mxu0 0.0
      %1594 = vmatprep.subr.mxu0 0.0
      %1595 = vmatpush1.xpose.msra.mxu0 0.0
      %1596 = vmatprep.subr.mxu0 0.0
      %1597 = vmatpush1.xpose.msra.mxu0 0.0
      %1598 = vmatprep.subr.mxu0 0.0
      %1599 = vmatpush1.xpose.msra.mxu0 0.0
      %1600 = vmatprep.subr.mxu0 0.0
      %1601 = vmatpush1.xpose.msra.mxu0 0.0
      %1602 = vmatprep.subr.mxu0 0.0
      %1603 = vmatpush1.xpose.msra.mxu0 0.0
      %1604 = vmatprep.subr.mxu0 0.0
      %1605 = vmatpush1.xpose.msra.mxu0 0.0
      %1606 = vmatprep.subr.mxu0 0.0
      %1607 = vmatpush1.xpose.msra.mxu0 0.0
      %1608 = vmatprep.subr.mxu0 0.0
      %1609 = vmatpush1.xpose.msra.mxu0 0.0
      %1610 = vmatprep.mubr.f32.mxu0 0.0
      %1611 = vmatmul.mubr.f32.gmra.mrb[0].mxu0 %v1541
      %v1612 = vpop.f32.mrb[0].mxu0
      %v1613 = vadd.f32 0.0, %v1612
      %v1614 = vpop.f32.mrb[0].mxu0
      %1615 = vdwg.mxu0
      %v1617 = vrot.slane %v1613, 7
      %1618 = vrot.lane.b32.xlu0 %v1617, 124
      %v1619 = vpop.permute.xlu0 %1618
      %v1621 = vsel %vm970, %v1613, %v1619
      %v1622 = vadd.f32 %v329, %v1621
      %v1623 = vmul.f32 %v1537, %v1217
      %v1625 = vsel %vm1463, %v1623, 0
      %v1627 = vsel %vm979, %v94, 0
      %1629 = vmatprep.subr.mxu0 0.0
      %1630 = vmatpush1.msra.mxu0 %v1627
      %1631 = vmatprep.subr.mxu0 0.0
      %1632 = vmatpush1.msra.mxu0 0.0
      %1633 = vmatprep.subr.mxu0 0.0
      %1634 = vmatpush1.msra.mxu0 0.0
      %1635 = vmatprep.subr.mxu0 0.0
      %1636 = vmatpush1.msra.mxu0 0.0
      %1637 = vmatprep.subr.mxu0 0.0
      %1638 = vmatpush1.msra.mxu0 0.0
      %1639 = vmatprep.subr.mxu0 0.0
      %1640 = vmatpush1.msra.mxu0 0.0
      %1641 = vmatprep.subr.mxu0 0.0
      %1642 = vmatpush1.msra.mxu0 0.0
      %1643 = vmatprep.subr.mxu0 0.0
      %1644 = vmatpush1.msra.mxu0 0.0
      %1645 = vmatprep.subr.mxu0 0.0
      %1646 = vmatpush1.msra.mxu0 0.0
      %1647 = vmatprep.subr.mxu0 0.0
      %1648 = vmatpush1.msra.mxu0 0.0
      %1649 = vmatprep.subr.mxu0 0.0
      %1650 = vmatpush1.msra.mxu0 0.0
      %1651 = vmatprep.subr.mxu0 0.0
      %1652 = vmatpush1.msra.mxu0 0.0
      %1653 = vmatprep.subr.mxu0 0.0
      %1654 = vmatpush1.msra.mxu0 0.0
      %1655 = vmatprep.subr.mxu0 0.0
      %1656 = vmatpush1.msra.mxu0 0.0
      %1657 = vmatprep.subr.mxu0 0.0
      %1658 = vmatpush1.msra.mxu0 0.0
      %1659 = vmatprep.subr.mxu0 0.0
      %1660 = vmatpush1.msra.mxu0 0.0
      %1661 = vmatprep.subr.mxu0 0.0
      %1662 = vmatpush1.msra.mxu0 0.0
      %1663 = vmatprep.subr.mxu0 0.0
      %1664 = vmatpush1.msra.mxu0 0.0
      %1665 = vmatprep.subr.mxu0 0.0
      %1666 = vmatpush1.msra.mxu0 0.0
      %1667 = vmatprep.subr.mxu0 0.0
      %1668 = vmatpush1.msra.mxu0 0.0
      %1669 = vmatprep.subr.mxu0 0.0
      %1670 = vmatpush1.msra.mxu0 0.0
      %1671 = vmatprep.subr.mxu0 0.0
      %1672 = vmatpush1.msra.mxu0 0.0
      %1673 = vmatprep.subr.mxu0 0.0
      %1674 = vmatpush1.msra.mxu0 0.0
      %1675 = vmatprep.subr.mxu0 0.0
      %1676 = vmatpush1.msra.mxu0 0.0
      %1677 = vmatprep.subr.mxu0 0.0
      %1678 = vmatpush1.msra.mxu0 0.0
      %1679 = vmatprep.subr.mxu0 0.0
      %1680 = vmatpush1.msra.mxu0 0.0
      %1681 = vmatprep.subr.mxu0 0.0
      %1682 = vmatpush1.msra.mxu0 0.0
      %1683 = vmatprep.subr.mxu0 0.0
      %1684 = vmatpush1.msra.mxu0 0.0
      %1685 = vmatprep.subr.mxu0 0.0
      %1686 = vmatpush1.msra.mxu0 0.0
      %1687 = vmatprep.subr.mxu0 0.0
      %1688 = vmatpush1.msra.mxu0 0.0
      %1689 = vmatprep.subr.mxu0 0.0
      %1690 = vmatpush1.msra.mxu0 0.0
      %1691 = vmatprep.subr.mxu0 0.0
      %1692 = vmatpush1.msra.mxu0 0.0
      %1693 = vmatprep.mubr.f32.mxu0 0.0
      %1694 = vmatmul.mubr.f32.gmra.mrb[0].mxu0 %v1625
      %v1695 = vpop.f32.mrb[0].mxu0
      %v1696 = vadd.f32 0.0, %v1695
      %v1697 = vpop.f32.mrb[0].mxu0
      %1698 = vdwg.mxu0
      %v1700 = vsel %vm85, %v1696, 0
      %1702 = vmatprep.subr.mxu0 0.0
      %1703 = vmatpush1.msra.mxu0 %v1138
      %1704 = vmatprep.subr.mxu0 0.0
      %1705 = vmatpush1.msra.mxu0 0.0
      %1706 = vmatprep.subr.mxu0 0.0
      %1707 = vmatpush1.msra.mxu0 0.0
      %1708 = vmatprep.subr.mxu0 0.0
      %1709 = vmatpush1.msra.mxu0 0.0
      %1710 = vmatprep.subr.mxu0 0.0
      %1711 = vmatpush1.msra.mxu0 0.0
      %1712 = vmatprep.subr.mxu0 0.0
      %1713 = vmatpush1.msra.mxu0 0.0
      %1714 = vmatprep.subr.mxu0 0.0
      %1715 = vmatpush1.msra.mxu0 0.0
      %1716 = vmatprep.subr.mxu0 0.0
      %1717 = vmatpush1.msra.mxu0 0.0
      %1718 = vmatprep.subr.mxu0 0.0
      %1719 = vmatpush1.msra.mxu0 0.0
      %1720 = vmatprep.subr.mxu0 0.0
      %1721 = vmatpush1.msra.mxu0 0.0
      %1722 = vmatprep.subr.mxu0 0.0
      %1723 = vmatpush1.msra.mxu0 0.0
      %1724 = vmatprep.subr.mxu0 0.0
      %1725 = vmatpush1.msra.mxu0 0.0
      %1726 = vmatprep.subr.mxu0 0.0
      %1727 = vmatpush1.msra.mxu0 0.0
      %1728 = vmatprep.subr.mxu0 0.0
      %1729 = vmatpush1.msra.mxu0 0.0
      %1730 = vmatprep.subr.mxu0 0.0
      %1731 = vmatpush1.msra.mxu0 0.0
      %1732 = vmatprep.subr.mxu0 0.0
      %1733 = vmatpush1.msra.mxu0 0.0
      %1734 = vmatprep.subr.mxu0 0.0
      %1735 = vmatpush1.msra.mxu0 0.0
      %1736 = vmatprep.subr.mxu0 0.0
      %1737 = vmatpush1.msra.mxu0 0.0
      %1738 = vmatprep.subr.mxu0 0.0
      %1739 = vmatpush1.msra.mxu0 0.0
      %1740 = vmatprep.subr.mxu0 0.0
      %1741 = vmatpush1.msra.mxu0 0.0
      %1742 = vmatprep.subr.mxu0 0.0
      %1743 = vmatpush1.msra.mxu0 0.0
      %1744 = vmatprep.subr.mxu0 0.0
      %1745 = vmatpush1.msra.mxu0 0.0
      %1746 = vmatprep.subr.mxu0 0.0
      %1747 = vmatpush1.msra.mxu0 0.0
      %1748 = vmatprep.subr.mxu0 0.0
      %1749 = vmatpush1.msra.mxu0 0.0
      %1750 = vmatprep.subr.mxu0 0.0
      %1751 = vmatpush1.msra.mxu0 0.0
      %1752 = vmatprep.subr.mxu0 0.0
      %1753 = vmatpush1.msra.mxu0 0.0
      %1754 = vmatprep.subr.mxu0 0.0
      %1755 = vmatpush1.msra.mxu0 0.0
      %1756 = vmatprep.subr.mxu0 0.0
      %1757 = vmatpush1.msra.mxu0 0.0
      %1758 = vmatprep.subr.mxu0 0.0
      %1759 = vmatpush1.msra.mxu0 0.0
      %1760 = vmatprep.subr.mxu0 0.0
      %1761 = vmatpush1.msra.mxu0 0.0
      %1762 = vmatprep.subr.mxu0 0.0
      %1763 = vmatpush1.msra.mxu0 0.0
      %1764 = vmatprep.subr.mxu0 0.0
      %1765 = vmatpush1.msra.mxu0 0.0
      %1766 = vmatprep.mubr.f32.mxu0 0.0
      %1767 = vmatmul.mubr.f32.gmra.mrb[0].mxu0 %v1700
      %v1768 = vpop.f32.mrb[0].mxu0
      %v1769 = vadd.f32 0.0, %v1768
      %v1770 = vpop.f32.mrb[0].mxu0
      %1771 = vdwg.mxu0
      %v1772 = vsub.f32 %v1138, %v1769
      %1773 = vst.msk [vmem:[#allocation2] sm:$0x3] %vm82, %v1622
      %1774 = vst.msk [vmem:[#allocation3] sm:$0xff] %vm85, %v1772
      %s1775 = scalar_lea.vmem %s21, %s108
      %1776 = vst.msk [vmem:[%s1775] sm:$0x3] %vm82, %v1622
    $region90: #{tpu_custom_call.1} parent=1 // loop_footer
      %s107 = sadd.s32 1, %s103
    $region91: #{tpu_custom_call.1} parent=1 // loop_footer_branch
      %102 = sbr.rel target = $region87
    $region92: #{tpu_custom_call.1} parent=1 // loop_exit
      _
    // Predicated region
    $region93: #{tpu_custom_call.1} parent=1 // pred_check
      _
    $region94: #{tpu_custom_call.1} parent=1 // pred_check_branch
      %1778 = sbr.rel (0) target = $region96
    $region95: #{tpu_custom_call.1} parent=1 // pred_region
      _
    $region96: #{tpu_custom_call.1} parent=1 // pred_fallthru
      _
    // Predicated region
    $region97: #{tpu_custom_call.1} parent=1 // pred_check
      _
    $region98: #{tpu_custom_call.1} parent=1 // pred_check_branch
      %1780 = sbr.rel (0) target = $region100
    $region99: #{tpu_custom_call.1} parent=1 // pred_region
      _
    $region100: #{tpu_custom_call.1} parent=1 // pred_fallthru
      _
    // Predicated region
    $region101: #{tpu_custom_call.1} parent=1 // pred_check
      _
    $region102: #{tpu_custom_call.1} parent=1 // pred_check_branch
      %1782 = sbr.rel (0) target = $region104
    $region103: #{tpu_custom_call.1} parent=1 // pred_region
      _
    $region104: #{tpu_custom_call.1} parent=1 // pred_fallthru
      _
    // Predicated region
    $region105: #{tpu_custom_call.1} parent=1 // pred_check
      _
    $region106: #{tpu_custom_call.1} parent=1 // pred_check_branch
      %1784 = sbr.rel (0) target = $region108
    $region107: #{tpu_custom_call.1} parent=1 // pred_region
      _
    $region108: #{tpu_custom_call.1} parent=1 // pred_fallthru
      _
    %1785 = vsyncpa [#allocation9], 1

</llo_original>
